<compile_context>
chip_gen: v5e
topology: v5e:2x2
jax: 0.10.0
libtpu: 0.0.40
codegen_flags: <defaults>
</compile_context>

<pallas_src>
import functools

import jax
import jax.numpy as jnp
from jax import lax
from jax.experimental import pallas as pl
from jax.experimental.pallas import tpu as pltpu

EPS = 1e-5
_F32 = jnp.float32
_BF16 = jnp.bfloat16


# ----------------------------------------------------------------------------- helpers
def _vmem_limit_bytes():
    """Per-chip VMEM limit (3/4 of physical, capped), with a safe fallback."""
    try:
        cap = int(getattr(pltpu.get_tpu_info(), "vmem_capacity_bytes",
                          64 * 1024 * 1024))
    except Exception:
        cap = 64 * 1024 * 1024
    return max(32 * 1024 * 1024, min(cap * 3 // 4, 100 * 1024 * 1024))


def _pick_td(D, HW, per_lane_bytes, budget):
    """Largest frame-tile TD (divisor of D) whose blocks stay tile-legal and fit budget."""
    legal = [t for t in range(1, D + 1)
             if D % t == 0 and (t == D or (t * HW) % 128 == 0)]
    fitting = [t for t in legal if t * HW * per_lane_bytes <= budget]
    return max(fitting) if fitting else min(legal)


# -----------------------------------------------------------------------------
# Pass A: conv1 = Conv3d(Cin, Cm, (3,1,1), pad=(1,0,0)) + per-block BN1 sum/sumsq.
# Block: x (Cin, D*HW) f32, u1 (Cm, D*HW) bf16, st (Cm, 2) f32.
# Temporal taps are lane shifts by one whole frame (HW lanes) with zero fill.
# -----------------------------------------------------------------------------
def conv1_stats_kernel(x_ref, w1t_ref, u1_ref, st_ref, *, HW):
    _, R = x_ref.shape
    Cm = u1_ref.shape[0]
    D = R // HW

    xv = x_ref[...].astype(_BF16)                                   # (Cin, R)
    acc = jnp.dot(w1t_ref[1], xv, preferred_element_type=_F32)      # centre tap (kt=1)
    if D > 1:
        z = jnp.zeros((Cm, HW), _F32)
        f0 = jnp.dot(w1t_ref[0], xv, preferred_element_type=_F32)   # uses frame d-1
        f2 = jnp.dot(w1t_ref[2], xv, preferred_element_type=_F32)   # uses frame d+1
        acc = acc + jnp.concatenate([z, f0[:, :R - HW]], axis=1)
        acc = acc + jnp.concatenate([f2[:, HW:], z], axis=1)

    u1_ref[...] = acc.astype(_BF16)                                  # bf16 only on store
    s = jnp.sum(acc, axis=1, keepdims=True)                          # f32 stats
    ss = jnp.sum(acc * acc, axis=1, keepdims=True)
    st_ref[...] = jnp.concatenate([s, ss], axis=1)


# -----------------------------------------------------------------------------
# Pass B: BN1-apply + ReLU + conv2 = Conv3d(Cm, Cm, (1,3,3), pad=(0,1,1)) + BN2 sum/sumsq.
# Block: u1/u2 (Cm, TD*HW) bf16.  kw shifts are +-1 lane, kh shifts are +-W lanes; both
# gated by precomputed (1, R) boundary masks (no im2col scratch, no integer div in-kernel).
# -----------------------------------------------------------------------------
def bn1_conv2_stats_kernel(u1_ref, sc1_ref, sh1_ref, w2m_ref,
                           mwg0_ref, mwlt_ref, mhg0_ref, mhlt_ref,
                           u2_ref, st_ref, *, H, W):
    Cm, R = u1_ref.shape

    y1 = jnp.maximum(u1_ref[...].astype(_F32) * sc1_ref[...] + sh1_ref[...], 0.0)
    zc = jnp.zeros((Cm, 1), _F32)
    ym = jnp.concatenate([zc, y1[:, :R - 1]], axis=1) * mwg0_ref[...]   # input col w-1
    yp = jnp.concatenate([y1[:, 1:], zc], axis=1) * mwlt_ref[...]       # input col w+1
    ys = (ym.astype(_BF16), y1.astype(_BF16), yp.astype(_BF16))         # kw = 0, 1, 2

    def mm(kh, kw):
        return jnp.dot(w2m_ref[kh, kw], ys[kw], preferred_element_type=_F32)

    acc = mm(1, 0) + mm(1, 1) + mm(1, 2)                                # kh = 1 (dh = 0)
    if H > 1:
        zw = jnp.zeros((Cm, W), _F32)
        up = mm(0, 0) + mm(0, 1) + mm(0, 2)                             # input row h-1
        dn = mm(2, 0) + mm(2, 1) + mm(2, 2)                             # input row h+1
        acc = acc + jnp.concatenate([zw, up[:, :R - W]], axis=1) * mhg0_ref[...]
        acc = acc + jnp.concatenate([dn[:, W:], zw], axis=1) * mhlt_ref[...]

    u2_ref[...] = acc.astype(_BF16)
    s = jnp.sum(acc, axis=1, keepdims=True)
    ss = jnp.sum(acc * acc, axis=1, keepdims=True)
    st_ref[...] = jnp.concatenate([s, ss], axis=1)


# -----------------------------------------------------------------------------
# Pass C: BN3 statistics via the Gram trick -- emits sum(y2) and G = y2 y2^T per block;
# conv3 (Cout-wide) is never recomputed here and u3 never touches HBM.
# -----------------------------------------------------------------------------
def bn2_gram_kernel(u2_ref, sc2_ref, sh2_ref, st_ref):
    y2 = jnp.maximum(u2_ref[...].astype(_F32) * sc2_ref[...] + sh2_ref[...], 0.0)
    s = jnp.sum(y2, axis=1, keepdims=True)                              # (Cm, 1)
    g = jnp.dot(y2, y2.T, preferred_element_type=_F32)                  # (Cm, Cm)
    st_ref[...] = jnp.concatenate([s, g], axis=1)                       # (Cm, Cm+1)


# -----------------------------------------------------------------------------
# Pass D: BN2-apply + ReLU + conv3 (1x1x1) + BN3-apply + residual + ReLU.
# Everything stays channels-major so the output is written directly in NCDHW layout.
# -----------------------------------------------------------------------------
def bn2_conv3_bn3_res_kernel(u2_ref, res_ref, sc2_ref, sh2_ref, w3m_ref,
                             sc3_ref, sh3_ref, out_ref):
    y2 = jnp.maximum(u2_ref[...].astype(_F32) * sc2_ref[...] + sh2_ref[...], 0.0)
    u3 = jnp.dot(w3m_ref[...], y2.astype(_BF16), preferred_element_type=_F32)
    z = u3 * sc3_ref[...] + sh3_ref[...]
    out_ref[...] = jnp.maximum(z + res_ref[...], 0.0)


# ----------------------------------------------------------------------------- host side
def _finalize_bn(stats, count, gamma, beta):
    """(sum, sumsq) partial blocks -> per-channel (scale, shift) as (C, 1) f32.

    NOTE: E[x^2]-E[x]^2 in f32; fine at these scales (TODO: two-pass variance for very
    large counts / large-mean activations)."""
    c = stats.shape[-2]
    flat = stats.reshape(-1, c, 2)
    s = jnp.sum(flat[:, :, 0], axis=0)
    ss = jnp.sum(flat[:, :, 1], axis=0)
    mean = s / count
    var = jnp.maximum(ss / count - mean * mean, 0.0)
    scale = gamma * lax.rsqrt(var + EPS)
    shift = beta - mean * scale
    return scale.reshape(c, 1).astype(_F32), shift.reshape(c, 1).astype(_F32)


def _finalize_bn3_from_gram(stats, count, w3_f32, gamma, beta):
    """sum(y2), Gram(y2) partial blocks -> BN3 affine for u3 = y2 @ w3."""
    cm = stats.shape[-2]
    flat = stats.reshape(-1, cm, cm + 1)
    sy = jnp.sum(flat[:, :, 0], axis=0)                    # (Cm,)
    gram = jnp.sum(flat[:, :, 1:], axis=0)                 # (Cm, Cm)
    mean = (sy @ w3_f32) / count                           # (Cout,)
    ex2 = jnp.sum(w3_f32 * (gram @ w3_f32), axis=0) / count
    var = jnp.maximum(ex2 - mean * mean, 0.0)
    scale = gamma * lax.rsqrt(var + EPS)
    shift = beta - mean * scale
    cout = w3_f32.shape[1]
    return scale.reshape(cout, 1).astype(_F32), shift.reshape(cout, 1).astype(_F32)


def i3d_bottleneck_forward(x, params):
    """x: (N, Cin, D, H, W) float32 (PyTorch NCDHW). Returns the same layout."""
    N, Cin, D, H, W = x.shape
    Cm = params["w1"].shape[-1]
    Cout = params["w3"].shape[-1]
    assert Cout == Cin, "downsample is None -> residual requires inplanes == 4*planes"
    HW = H * W
    R_all = D * HW
    M = N * R_all

    # Weights cast once on the host (tiny); kernels take bf16 operands, f32 accumulation.
    w1t = jnp.transpose(params["w1"], (0, 2, 1)).astype(_BF16)      # (3, Cm, Cin)
    w2m = jnp.transpose(params["w2"], (0, 1, 3, 2)).astype(_BF16)   # (3, 3, Cout=Cm, Cin=Cm)
    w3m = jnp.transpose(params["w3"], (1, 0)).astype(_BF16)         # (Cout, Cm)
    w3f = params["w3"].astype(_F32)

    # Free, metadata-only view; no HBM transpose anywhere.
    x3 = x.reshape(N, Cin, R_all)

    vmem_limit = _vmem_limit_bytes()
    budget = vmem_limit // 6
    per_lane = max(40 * Cm + 24,                       # pass B working set per lane
                   12 * Cm + 10 * Cin + 14 * Cout)     # pass D working set per lane
    TD = _pick_td(D, HW, per_lane, budget)
    nd = D // TD
    R = TD * HW

    def cparams(sem):
        return pltpu.CompilerParams(dimension_semantics=sem,
                                    vmem_limit_bytes=int(vmem_limit))

    # ---------------- pass A: conv1 + BN1 partial stats ----------------
    u1, st1 = pl.pallas_call(
        functools.partial(conv1_stats_kernel, HW=HW),
        grid=(N,),
        in_specs=[
            pl.BlockSpec((None, Cin, R_all), lambda n: (n, 0, 0)),
            pl.BlockSpec((3, Cm, Cin), lambda n: (0, 0, 0)),
        ],
        out_specs=[
            pl.BlockSpec((None, Cm, R_all), lambda n: (n, 0, 0)),
            pl.BlockSpec((None, Cm, 2), lambda n: (n, 0, 0)),
        ],
        out_shape=[
            jax.ShapeDtypeStruct((N, Cm, R_all), _BF16),
            jax.ShapeDtypeStruct((N, Cm, 2), _F32),
        ],
        compiler_params=cparams(("parallel",)),
        cost_estimate=pl.CostEstimate(flops=int(2 * 3 * M * Cin * Cm),
                                      transcendentals=0,
                                      bytes_accessed=int(M * (4 * Cin + 2 * Cm))),
    )(x3, w1t)
    sc1, sh1 = _finalize_bn(st1, float(M), params["g1"], params["b1"])

    # Precomputed conv2 boundary masks (one per shifted tap), each (1, R) f32.
    r_idx = jnp.arange(R, dtype=jnp.int32)
    wpos = r_idx % W
    hpos = (r_idx // W) % H
    m_wg0 = (wpos > 0).astype(_F32).reshape(1, R)
    m_wlt = (wpos < W - 1).astype(_F32).reshape(1, R)
    m_hg0 = (hpos > 0).astype(_F32).reshape(1, R)
    m_hlt = (hpos < H - 1).astype(_F32).reshape(1, R)

    # ---------------- pass B: BN1 + ReLU + conv2 + BN2 partial stats ----------------
    u2, st2 = pl.pallas_call(
        functools.partial(bn1_conv2_stats_kernel, H=H, W=W),
        grid=(N, nd),
        in_specs=[
            pl.BlockSpec((None, Cm, R), lambda n, t: (n, 0, t)),
            pl.BlockSpec((Cm, 1), lambda n, t: (0, 0)),
            pl.BlockSpec((Cm, 1), lambda n, t: (0, 0)),
            pl.BlockSpec((3, 3, Cm, Cm), lambda n, t: (0, 0, 0, 0)),
            pl.BlockSpec((1, R), lambda n, t: (0, 0)),
            pl.BlockSpec((1, R), lambda n, t: (0, 0)),
            pl.BlockSpec((1, R), lambda n, t: (0, 0)),
            pl.BlockSpec((1, R), lambda n, t: (0, 0)),
        ],
        out_specs=[
            pl.BlockSpec((None, Cm, R), lambda n, t: (n, 0, t)),
            pl.BlockSpec((None, None, Cm, 2), lambda n, t: (n, t, 0, 0)),
        ],
        out_shape=[
            jax.ShapeDtypeStruct((N, Cm, R_all), _BF16),
            jax.ShapeDtypeStruct((N, nd, Cm, 2), _F32),
        ],
        compiler_params=cparams(("parallel", "parallel")),
        cost_estimate=pl.CostEstimate(flops=int(2 * 9 * M * Cm * Cm),
                                      transcendentals=0,
                                      bytes_accessed=int(4 * M * Cm)),
    )(u1, sc1, sh1, w2m, m_wg0, m_wlt, m_hg0, m_hlt)
    sc2, sh2 = _finalize_bn(st2, float(M), params["g2"], params["b2"])

    # ---------------- pass C: BN3 statistics via Gram (u3 never hits HBM) -----------
    st3 = pl.pallas_call(
        bn2_gram_kernel,
        grid=(N, nd),
        in_specs=[
            pl.BlockSpec((None, Cm, R), lambda n, t: (n, 0, t)),
            pl.BlockSpec((Cm, 1), lambda n, t: (0, 0)),
            pl.BlockSpec((Cm, 1), lambda n, t: (0, 0)),
        ],
        out_specs=pl.BlockSpec((None, None, Cm, Cm + 1), lambda n, t: (n, t, 0, 0)),
        out_shape=jax.ShapeDtypeStruct((N, nd, Cm, Cm + 1), _F32),
        compiler_params=cparams(("parallel", "parallel")),
        cost_estimate=pl.CostEstimate(flops=int(2 * M * Cm * Cm),
                                      transcendentals=0,
                                      bytes_accessed=int(2 * M * Cm)),
    )(u2, sc2, sh2)
    sc3, sh3 = _finalize_bn3_from_gram(st3, float(M), w3f, params["g3"], params["b3"])

    # ---------------- pass D: BN2 + ReLU + conv3 + BN3 + residual + ReLU ------------
    out3 = pl.pallas_call(
        bn2_conv3_bn3_res_kernel,
        grid=(N, nd),
        in_specs=[
            pl.BlockSpec((None, Cm, R), lambda n, t: (n, 0, t)),
            pl.BlockSpec((None, Cin, R), lambda n, t: (n, 0, t)),   # residual, read in place
            pl.BlockSpec((Cm, 1), lambda n, t: (0, 0)),
            pl.BlockSpec((Cm, 1), lambda n, t: (0, 0)),
            pl.BlockSpec((Cout, Cm), lambda n, t: (0, 0)),
            pl.BlockSpec((Cout, 1), lambda n, t: (0, 0)),
            pl.BlockSpec((Cout, 1), lambda n, t: (0, 0)),
        ],
        out_specs=pl.BlockSpec((None, Cout, R), lambda n, t: (n, 0, t)),
        out_shape=jax.ShapeDtypeStruct((N, Cout, R_all), _F32),
        compiler_params=cparams(("parallel", "parallel")),
        cost_estimate=pl.CostEstimate(flops=int(2 * M * Cm * Cout),
                                      transcendentals=0,
                                      bytes_accessed=int(M * (2 * Cm + 4 * Cin + 4 * Cout))),
    )(u2, x3, sc2, sh2, w3m, sc3, sh3)

    return out3.reshape(N, Cout, D, H, W)        # free reshape; already NCDHW order


# ----------------------------- pure-JAX reference (f32) -----------------------------
def reference_forward(x, params):
    def bn(o, g, b):
        m = o.mean(axis=(0, 2, 3, 4), keepdims=True)
        v = jnp.mean((o - m) ** 2, axis=(0, 2, 3, 4), keepdims=True)
        return (o - m) * lax.rsqrt(v + EPS) * g.reshape(1, -1, 1, 1, 1) \
            + b.reshape(1, -1, 1, 1, 1)

    dn = ("NCDHW", "OIDHW", "NCDHW")
    w1 = jnp.transpose(params["w1"], (2, 1, 0))[:, :, :, None, None]
    w2 = jnp.transpose(params["w2"], (3, 2, 0, 1))[:, :, None, :, :]
    w3 = params["w3"].T[:, :, None, None, None]

    o = lax.conv_general_dilated(x, w1, (1, 1, 1), ((1, 1), (0, 0), (0, 0)),
                                 dimension_numbers=dn)
    o = jnp.maximum(bn(o, params["g1"], params["b1"]), 0.0)
    o = lax.conv_general_dilated(o, w2, (1, 1, 1), ((0, 0), (1, 1), (1, 1)),
                                 dimension_numbers=dn)
    o = jnp.maximum(bn(o, params["g2"], params["b2"]), 0.0)
    o = lax.conv_general_dilated(o, w3, (1, 1, 1), ((0, 0), (0, 0), (0, 0)),
                                 dimension_numbers=dn)
    o = bn(o, params["g3"], params["b3"])
    return jnp.maximum(o + x, 0.0)


if __name__ == "__main__":
    # Small shapes consistent with the module: batch=2, inplanes=32, planes=8,
    # frames D=4, spatial 8x8 (inplanes == 4*planes so the residual add is valid).
    N, D, H, W = 2, 4, 8, 8
    planes = 8
    inplanes = planes * 4          # 32
    Cout = planes * 4              # 32

    key = jax.random.PRNGKey(0)
    keys = jax.random.split(key, 10)

    x = jax.random.normal(keys[0], (N, inplanes, D, H, W), jnp.float32)

    params = {
        # conv1 weight as (kt, Cin, Cm); conv2 as (kh, kw, Cm, Cm); conv3 as (Cm, Cout)
        "w1": jax.random.normal(keys[1], (3, inplanes, planes), jnp.float32)
              * (1.0 / jnp.sqrt(3.0 * inplanes)),
        "w2": jax.random.normal(keys[2], (3, 3, planes, planes), jnp.float32)
              * (1.0 / jnp.sqrt(9.0 * planes)),
        "w3": jax.random.normal(keys[3], (planes, Cout), jnp.float32)
              * (1.0 / jnp.sqrt(1.0 * planes)),
        "g1": 1.0 + 0.1 * jax.random.normal(keys[4], (planes,), jnp.float32),
        "b1": 0.1 * jax.random.normal(keys[5], (planes,), jnp.float32),
        "g2": 1.0 + 0.1 * jax.random.normal(keys[6], (planes,), jnp.float32),
        "b2": 0.1 * jax.random.normal(keys[7], (planes,), jnp.float32),
        "g3": 1.0 + 0.1 * jax.random.normal(keys[8], (Cout,), jnp.float32),
        "b3": 0.1 * jax.random.normal(keys[9], (Cout,), jnp.float32),
    }

    out = jax.jit(i3d_bottleneck_forward)(x, params)
    out = jax.block_until_ready(out)

    ref = jax.jit(reference_forward)(x, params)
    ref = jax.block_until_ready(ref)

    assert out.shape == (N, Cout, D, H, W), out.shape
    err = jnp.abs(out.astype(jnp.float32) - ref)
    max_err = float(jnp.max(err))
    rel_rms = float(jnp.sqrt(jnp.mean(err ** 2) / (jnp.mean(ref ** 2) + 1e-12)))
    # bf16 activations/operands (per perf review) loosen tolerance vs the f32 reference.
    assert rel_rms < 4e-2 and max_err < 3e-1, (rel_rms, max_err)

    print("KERNEL_OK")
</pallas_src>

<mosaic_0001>
module attributes {stable_mosaic.version = 11 : i64} {
  func.func @conv1_stats_kernel(%arg0: i32, %arg1: memref<1x32x256xf32, #tpu.memory_space<vmem>>, %arg2: memref<3x8x32xbf16, #tpu.memory_space<vmem>>, %arg3: memref<1x8x256xbf16, #tpu.memory_space<vmem>>, %arg4: memref<1x8x2xf32, #tpu.memory_space<vmem>>) attributes {dimension_semantics = [#tpu.dimension_semantics<parallel>], iteration_bounds = array<i64: 2>, scalar_prefetch = 0 : i64, scratch_operands = 0 : i64, tpu.core_type = #tpu.core_type<tc>, window_params = [{transform_indices = @transform_0, window_bounds = array<i64: 1, 32, 256>}, {pipeline_mode = #tpu.pipeline_mode<synchronous>, transform_indices = @transform_1, window_bounds = array<i64: 3, 8, 32>}, {transform_indices = @transform_2, window_bounds = array<i64: 1, 8, 256>}, {transform_indices = @transform_3, window_bounds = array<i64: 1, 8, 2>}]} {
    %c0 = arith.constant 0 : index
    %c0_0 = arith.constant 0 : index
    %c0_1 = arith.constant 0 : index
    %0 = vector.load %arg1[%c0, %c0_0, %c0_1] : memref<1x32x256xf32, #tpu.memory_space<vmem>>, vector<1x32x256xf32>
    %1 = vector.shape_cast %0 : vector<1x32x256xf32> to vector<32x256xf32>
    %2 = arith.truncf %1 : vector<32x256xf32> to vector<32x256xbf16>
    %c1 = arith.constant 1 : index
    %c0_2 = arith.constant 0 : index
    %c0_3 = arith.constant 0 : index
    %3 = vector.load %arg2[%c1, %c0_2, %c0_3] : memref<3x8x32xbf16, #tpu.memory_space<vmem>>, vector<1x8x32xbf16>
    %4 = vector.shape_cast %3 : vector<1x8x32xbf16> to vector<8x32xbf16>
    %cst = arith.constant dense<0.000000e+00> : vector<8x256xf32>
    %5 = tpu.matmul %4, %2, %cst {dimension_numbers = #tpu.dot_dimension_numbers<[1], [0], [0], [1], [0, 0, 1, 1], [], []>} : vector<8x32xbf16>, vector<32x256xbf16>, vector<8x256xf32> -> vector<8x256xf32>
    %cst_4 = arith.constant 0.000000e+00 : f32
    %6 = vector.broadcast %cst_4 : f32 to vector<8x64xf32>
    %c0_5 = arith.constant 0 : index
    %c0_6 = arith.constant 0 : index
    %c0_7 = arith.constant 0 : index
    %7 = vector.load %arg2[%c0_5, %c0_6, %c0_7] : memref<3x8x32xbf16, #tpu.memory_space<vmem>>, vector<1x8x32xbf16>
    %8 = vector.shape_cast %7 : vector<1x8x32xbf16> to vector<8x32xbf16>
    %cst_8 = arith.constant dense<0.000000e+00> : vector<8x256xf32>
    %9 = tpu.matmul %8, %2, %cst_8 {dimension_numbers = #tpu.dot_dimension_numbers<[1], [0], [0], [1], [0, 0, 1, 1], [], []>} : vector<8x32xbf16>, vector<32x256xbf16>, vector<8x256xf32> -> vector<8x256xf32>
    %c2 = arith.constant 2 : index
    %c0_9 = arith.constant 0 : index
    %c0_10 = arith.constant 0 : index
    %10 = vector.load %arg2[%c2, %c0_9, %c0_10] : memref<3x8x32xbf16, #tpu.memory_space<vmem>>, vector<1x8x32xbf16>
    %11 = vector.shape_cast %10 : vector<1x8x32xbf16> to vector<8x32xbf16>
    %cst_11 = arith.constant dense<0.000000e+00> : vector<8x256xf32>
    %12 = tpu.matmul %11, %2, %cst_11 {dimension_numbers = #tpu.dot_dimension_numbers<[1], [0], [0], [1], [0, 0, 1, 1], [], []>} : vector<8x32xbf16>, vector<32x256xbf16>, vector<8x256xf32> -> vector<8x256xf32>
    %13 = vector.extract_strided_slice %9 {offsets = [0, 0], sizes = [8, 192], strides = [1, 1]} : vector<8x256xf32> to vector<8x192xf32>
    %14 = tpu.concatenate %6, %13 in 1 : vector<8x64xf32>, vector<8x192xf32> -> vector<8x256xf32>
    %15 = arith.addf %5, %14 : vector<8x256xf32>
    %16 = vector.extract_strided_slice %12 {offsets = [0, 64], sizes = [8, 192], strides = [1, 1]} : vector<8x256xf32> to vector<8x192xf32>
    %17 = tpu.concatenate %16, %6 in 1 : vector<8x192xf32>, vector<8x64xf32> -> vector<8x256xf32>
    %18 = arith.addf %15, %17 : vector<8x256xf32>
    %19 = arith.truncf %18 : vector<8x256xf32> to vector<8x256xbf16>
    %c0_12 = arith.constant 0 : index
    %c0_13 = arith.constant 0 : index
    %c0_14 = arith.constant 0 : index
    %20 = vector.load %arg3[%c0_12, %c0_13, %c0_14] : memref<1x8x256xbf16, #tpu.memory_space<vmem>>, vector<1x8x256xbf16>
    %21 = vector.shape_cast %20 : vector<1x8x256xbf16> to vector<8x256xbf16>
    %22 = vector.shape_cast %19 : vector<8x256xbf16> to vector<1x8x256xbf16>
    tpu.vector_store %arg3[%c0_12, %c0_13, %c0_14], %22 {strides = array<i32>} : memref<1x8x256xbf16, #tpu.memory_space<vmem>>, vector<1x8x256xbf16>,
    %cst_15 = arith.constant dense<0.000000e+00> : vector<8xf32>
    %23 = vector.multi_reduction <add>, %18, %cst_15 [1] : vector<8x256xf32> to vector<8xf32>
    %24 = vector.shape_cast %23 : vector<8xf32> to vector<8x1xf32>
    %25 = arith.mulf %18, %18 : vector<8x256xf32>
    %cst_16 = arith.constant dense<0.000000e+00> : vector<8xf32>
    %26 = vector.multi_reduction <add>, %25, %cst_16 [1] : vector<8x256xf32> to vector<8xf32>
    %27 = vector.shape_cast %26 : vector<8xf32> to vector<8x1xf32>
    %28 = tpu.concatenate %24, %27 in 1 : vector<8x1xf32>, vector<8x1xf32> -> vector<8x2xf32>
    %c0_17 = arith.constant 0 : index
    %c0_18 = arith.constant 0 : index
    %c0_19 = arith.constant 0 : index
    %29 = vector.load %arg4[%c0_17, %c0_18, %c0_19] : memref<1x8x2xf32, #tpu.memory_space<vmem>>, vector<1x8x2xf32>
    %30 = vector.shape_cast %29 : vector<1x8x2xf32> to vector<8x2xf32>
    %31 = vector.shape_cast %28 : vector<8x2xf32> to vector<1x8x2xf32>
    tpu.vector_store %arg4[%c0_17, %c0_18, %c0_19], %31 {strides = array<i32>} : memref<1x8x2xf32, #tpu.memory_space<vmem>>, vector<1x8x2xf32>,
    return
  }
  func.func @transform_0(%arg0: i32) -> (i32, i32, i32) {
    %c0_i32 = arith.constant 0 : i32
    %c0_i32_0 = arith.constant 0 : i32
    %c0_i32_1 = arith.constant 0 : i32
    return %arg0, %c0_i32, %c0_i32_0 : i32, i32, i32
  }
  func.func @transform_1(%arg0: i32) -> (i32, i32, i32) {
    %c0_i32 = arith.constant 0 : i32
    %c0_i32_0 = arith.constant 0 : i32
    %c0_i32_1 = arith.constant 0 : i32
    %c0_i32_2 = arith.constant 0 : i32
    return %c0_i32, %c0_i32_0, %c0_i32_1 : i32, i32, i32
  }
  func.func @transform_2(%arg0: i32) -> (i32, i32, i32) {
    %c0_i32 = arith.constant 0 : i32
    %c0_i32_0 = arith.constant 0 : i32
    %c0_i32_1 = arith.constant 0 : i32
    return %arg0, %c0_i32, %c0_i32_0 : i32, i32, i32
  }
  func.func @transform_3(%arg0: i32) -> (i32, i32, i32) {
    %c0_i32 = arith.constant 0 : i32
    %c0_i32_0 = arith.constant 0 : i32
    %c0_i32_1 = arith.constant 0 : i32
    return %arg0, %c0_i32, %c0_i32_0 : i32, i32, i32
  }
}

module attributes {stable_mosaic.version = 11 : i64} {
  func.func @bn1_conv2_stats_kernel(%arg0: i32, %arg1: i32, %arg2: memref<1x8x256xbf16, #tpu.memory_space<vmem>>, %arg3: memref<8x1xf32, #tpu.memory_space<vmem>>, %arg4: memref<8x1xf32, #tpu.memory_space<vmem>>, %arg5: memref<3x3x8x8xbf16, #tpu.memory_space<vmem>>, %arg6: memref<1x256xf32, #tpu.memory_space<vmem>>, %arg7: memref<1x256xf32, #tpu.memory_space<vmem>>, %arg8: memref<1x256xf32, #tpu.memory_space<vmem>>, %arg9: memref<1x256xf32, #tpu.memory_space<vmem>>, %arg10: memref<1x8x256xbf16, #tpu.memory_space<vmem>>, %arg11: memref<1x1x8x2xf32, #tpu.memory_space<vmem>>) attributes {dimension_semantics = [#tpu.dimension_semantics<parallel>, #tpu.dimension_semantics<parallel>], iteration_bounds = array<i64: 2, 1>, scalar_prefetch = 0 : i64, scratch_operands = 0 : i64, tpu.core_type = #tpu.core_type<tc>, window_params = [{transform_indices = @transform_0, window_bounds = array<i64: 1, 8, 256>}, {pipeline_mode = #tpu.pipeline_mode<synchronous>, transform_indices = @transform_1, window_bounds = array<i64: 8, 1>}, {pipeline_mode = #tpu.pipeline_mode<synchronous>, transform_indices = @transform_2, window_bounds = array<i64: 8, 1>}, {pipeline_mode = #tpu.pipeline_mode<synchronous>, transform_indices = @transform_3, window_bounds = array<i64: 3, 3, 8, 8>}, {pipeline_mode = #tpu.pipeline_mode<synchronous>, transform_indices = @transform_4, window_bounds = array<i64: 1, 256>}, {pipeline_mode = #tpu.pipeline_mode<synchronous>, transform_indices = @transform_5, window_bounds = array<i64: 1, 256>}, {pipeline_mode = #tpu.pipeline_mode<synchronous>, transform_indices = @transform_6, window_bounds = array<i64: 1, 256>}, {pipeline_mode = #tpu.pipeline_mode<synchronous>, transform_indices = @transform_7, window_bounds = array<i64: 1, 256>}, {transform_indices = @transform_8, window_bounds = array<i64: 1, 8, 256>}, {transform_indices = @transform_9, window_bounds = array<i64: 1, 1, 8, 2>}]} {
    %c0 = arith.constant 0 : index
    %c0_0 = arith.constant 0 : index
    %c0_1 = arith.constant 0 : index
    %0 = vector.load %arg2[%c0, %c0_0, %c0_1] : memref<1x8x256xbf16, #tpu.memory_space<vmem>>, vector<1x8x256xbf16>
    %1 = vector.shape_cast %0 : vector<1x8x256xbf16> to vector<8x256xbf16>
    %2 = arith.extf %1 : vector<8x256xbf16> to vector<8x256xf32>
    %c0_2 = arith.constant 0 : index
    %c0_3 = arith.constant 0 : index
    %3 = vector.load %arg3[%c0_2, %c0_3] : memref<8x1xf32, #tpu.memory_space<vmem>>, vector<8x1xf32>
    %4 = vector.broadcast %3 : vector<8x1xf32> to vector<8x256xf32>
    %5 = arith.mulf %2, %4 : vector<8x256xf32>
    %c0_4 = arith.constant 0 : index
    %c0_5 = arith.constant 0 : index
    %6 = vector.load %arg4[%c0_4, %c0_5] : memref<8x1xf32, #tpu.memory_space<vmem>>, vector<8x1xf32>
    %7 = vector.broadcast %6 : vector<8x1xf32> to vector<8x256xf32>
    %8 = arith.addf %5, %7 : vector<8x256xf32>
    %cst = arith.constant 0.000000e+00 : f32
    %9 = vector.broadcast %cst : f32 to vector<8x256xf32>
    %10 = arith.maximumf %8, %9 : vector<8x256xf32>
    %cst_6 = arith.constant 0.000000e+00 : f32
    %11 = vector.broadcast %cst_6 : f32 to vector<8x1xf32>
    %12 = vector.extract_strided_slice %10 {offsets = [0, 0], sizes = [8, 255], strides = [1, 1]} : vector<8x256xf32> to vector<8x255xf32>
    %13 = tpu.concatenate %11, %12 in 1 : vector<8x1xf32>, vector<8x255xf32> -> vector<8x256xf32>
    %c0_7 = arith.constant 0 : index
    %c0_8 = arith.constant 0 : index
    %14 = vector.load %arg6[%c0_7, %c0_8] : memref<1x256xf32, #tpu.memory_space<vmem>>, vector<1x256xf32>
    %15 = vector.broadcast %14 : vector<1x256xf32> to vector<8x256xf32>
    %16 = arith.mulf %13, %15 : vector<8x256xf32>
    %17 = vector.extract_strided_slice %10 {offsets = [0, 1], sizes = [8, 255], strides = [1, 1]} : vector<8x256xf32> to vector<8x255xf32>
    %18 = tpu.concatenate %17, %11 in 1 : vector<8x255xf32>, vector<8x1xf32> -> vector<8x256xf32>
    %c0_9 = arith.constant 0 : index
    %c0_10 = arith.constant 0 : index
    %19 = vector.load %arg7[%c0_9, %c0_10] : memref<1x256xf32, #tpu.memory_space<vmem>>, vector<1x256xf32>
    %20 = vector.broadcast %19 : vector<1x256xf32> to vector<8x256xf32>
    %21 = arith.mulf %18, %20 : vector<8x256xf32>
    %22 = arith.truncf %16 : vector<8x256xf32> to vector<8x256xbf16>
    %23 = arith.truncf %10 : vector<8x256xf32> to vector<8x256xbf16>
    %24 = arith.truncf %21 : vector<8x256xf32> to vector<8x256xbf16>
    %c1 = arith.constant 1 : index
    %c0_11 = arith.constant 0 : index
    %c0_12 = arith.constant 0 : index
    %c0_13 = arith.constant 0 : index
    %25 = vector.load %arg5[%c1, %c0_11, %c0_12, %c0_13] : memref<3x3x8x8xbf16, #tpu.memory_space<vmem>>, vector<1x1x8x8xbf16>
    %26 = vector.shape_cast %25 : vector<1x1x8x8xbf16> to vector<8x8xbf16>
    %cst_14 = arith.constant dense<0.000000e+00> : vector<8x256xf32>
    %27 = tpu.matmul %26, %22, %cst_14 {dimension_numbers = #tpu.dot_dimension_numbers<[1], [0], [0], [1], [0, 0, 1, 1], [], []>} : vector<8x8xbf16>, vector<8x256xbf16>, vector<8x256xf32> -> vector<8x256xf32>
    %c1_15 = arith.constant 1 : index
    %c1_16 = arith.constant 1 : index
    %c0_17 = arith.constant 0 : index
    %c0_18 = arith.constant 0 : index
    %28 = vector.load %arg5[%c1_15, %c1_16, %c0_17, %c0_18] : memref<3x3x8x8xbf16, #tpu.memory_space<vmem>>, vector<1x1x8x8xbf16>
    %29 = vector.shape_cast %28 : vector<1x1x8x8xbf16> to vector<8x8xbf16>
    %cst_19 = arith.constant dense<0.000000e+00> : vector<8x256xf32>
    %30 = tpu.matmul %29, %23, %cst_19 {dimension_numbers = #tpu.dot_dimension_numbers<[1], [0], [0], [1], [0, 0, 1, 1], [], []>} : vector<8x8xbf16>, vector<8x256xbf16>, vector<8x256xf32> -> vector<8x256xf32>
    %31 = arith.addf %27, %30 : vector<8x256xf32>
    %c1_20 = arith.constant 1 : index
    %c2 = arith.constant 2 : index
    %c0_21 = arith.constant 0 : index
    %c0_22 = arith.constant 0 : index
    %32 = vector.load %arg5[%c1_20, %c2, %c0_21, %c0_22] : memref<3x3x8x8xbf16, #tpu.memory_space<vmem>>, vector<1x1x8x8xbf16>
    %33 = vector.shape_cast %32 : vector<1x1x8x8xbf16> to vector<8x8xbf16>
    %cst_23 = arith.constant dense<0.000000e+00> : vector<8x256xf32>
    %34 = tpu.matmul %33, %24, %cst_23 {dimension_numbers = #tpu.dot_dimension_numbers<[1], [0], [0], [1], [0, 0, 1, 1], [], []>} : vector<8x8xbf16>, vector<8x256xbf16>, vector<8x256xf32> -> vector<8x256xf32>
    %35 = arith.addf %31, %34 : vector<8x256xf32>
    %cst_24 = arith.constant 0.000000e+00 : f32
    %36 = vector.broadcast %cst_24 : f32 to vector<8x8xf32>
    %c0_25 = arith.constant 0 : index
    %c0_26 = arith.constant 0 : index
    %c0_27 = arith.constant 0 : index
    %c0_28 = arith.constant 0 : index
    %37 = vector.load %arg5[%c0_25, %c0_26, %c0_27, %c0_28] : memref<3x3x8x8xbf16, #tpu.memory_space<vmem>>, vector<1x1x8x8xbf16>
    %38 = vector.shape_cast %37 : vector<1x1x8x8xbf16> to vector<8x8xbf16>
    %cst_29 = arith.constant dense<0.000000e+00> : vector<8x256xf32>
    %39 = tpu.matmul %38, %22, %cst_29 {dimension_numbers = #tpu.dot_dimension_numbers<[1], [0], [0], [1], [0, 0, 1, 1], [], []>} : vector<8x8xbf16>, vector<8x256xbf16>, vector<8x256xf32> -> vector<8x256xf32>
    %c0_30 = arith.constant 0 : index
    %c1_31 = arith.constant 1 : index
    %c0_32 = arith.constant 0 : index
    %c0_33 = arith.constant 0 : index
    %40 = vector.load %arg5[%c0_30, %c1_31, %c0_32, %c0_33] : memref<3x3x8x8xbf16, #tpu.memory_space<vmem>>, vector<1x1x8x8xbf16>
    %41 = vector.shape_cast %40 : vector<1x1x8x8xbf16> to vector<8x8xbf16>
    %cst_34 = arith.constant dense<0.000000e+00> : vector<8x256xf32>
    %42 = tpu.matmul %41, %23, %cst_34 {dimension_numbers = #tpu.dot_dimension_numbers<[1], [0], [0], [1], [0, 0, 1, 1], [], []>} : vector<8x8xbf16>, vector<8x256xbf16>, vector<8x256xf32> -> vector<8x256xf32>
    %43 = arith.addf %39, %42 : vector<8x256xf32>
    %c0_35 = arith.constant 0 : index
    %c2_36 = arith.constant 2 : index
    %c0_37 = arith.constant 0 : index
    %c0_38 = arith.constant 0 : index
    %44 = vector.load %arg5[%c0_35, %c2_36, %c0_37, %c0_38] : memref<3x3x8x8xbf16, #tpu.memory_space<vmem>>, vector<1x1x8x8xbf16>
    %45 = vector.shape_cast %44 : vector<1x1x8x8xbf16> to vector<8x8xbf16>
    %cst_39 = arith.constant dense<0.000000e+00> : vector<8x256xf32>
    %46 = tpu.matmul %45, %24, %cst_39 {dimension_numbers = #tpu.dot_dimension_numbers<[1], [0], [0], [1], [0, 0, 1, 1], [], []>} : vector<8x8xbf16>, vector<8x256xbf16>, vector<8x256xf32> -> vector<8x256xf32>
    %47 = arith.addf %43, %46 : vector<8x256xf32>
    %c2_40 = arith.constant 2 : index
    %c0_41 = arith.constant 0 : index
    %c0_42 = arith.constant 0 : index
    %c0_43 = arith.constant 0 : index
    %48 = vector.load %arg5[%c2_40, %c0_41, %c0_42, %c0_43] : memref<3x3x8x8xbf16, #tpu.memory_space<vmem>>, vector<1x1x8x8xbf16>
    %49 = vector.shape_cast %48 : vector<1x1x8x8xbf16> to vector<8x8xbf16>
    %cst_44 = arith.constant dense<0.000000e+00> : vector<8x256xf32>
    %50 = tpu.matmul %49, %22, %cst_44 {dimension_numbers = #tpu.dot_dimension_numbers<[1], [0], [0], [1], [0, 0, 1, 1], [], []>} : vector<8x8xbf16>, vector<8x256xbf16>, vector<8x256xf32> -> vector<8x256xf32>
    %c2_45 = arith.constant 2 : index
    %c1_46 = arith.constant 1 : index
    %c0_47 = arith.constant 0 : index
    %c0_48 = arith.constant 0 : index
    %51 = vector.load %arg5[%c2_45, %c1_46, %c0_47, %c0_48] : memref<3x3x8x8xbf16, #tpu.memory_space<vmem>>, vector<1x1x8x8xbf16>
    %52 = vector.shape_cast %51 : vector<1x1x8x8xbf16> to vector<8x8xbf16>
    %cst_49 = arith.constant dense<0.000000e+00> : vector<8x256xf32>
    %53 = tpu.matmul %52, %23, %cst_49 {dimension_numbers = #tpu.dot_dimension_numbers<[1], [0], [0], [1], [0, 0, 1, 1], [], []>} : vector<8x8xbf16>, vector<8x256xbf16>, vector<8x256xf32> -> vector<8x256xf32>
    %54 = arith.addf %50, %53 : vector<8x256xf32>
    %c2_50 = arith.constant 2 : index
    %c2_51 = arith.constant 2 : index
    %c0_52 = arith.constant 0 : index
    %c0_53 = arith.constant 0 : index
    %55 = vector.load %arg5[%c2_50, %c2_51, %c0_52, %c0_53] : memref<3x3x8x8xbf16, #tpu.memory_space<vmem>>, vector<1x1x8x8xbf16>
    %56 = vector.shape_cast %55 : vector<1x1x8x8xbf16> to vector<8x8xbf16>
    %cst_54 = arith.constant dense<0.000000e+00> : vector<8x256xf32>
    %57 = tpu.matmul %56, %24, %cst_54 {dimension_numbers = #tpu.dot_dimension_numbers<[1], [0], [0], [1], [0, 0, 1, 1], [], []>} : vector<8x8xbf16>, vector<8x256xbf16>, vector<8x256xf32> -> vector<8x256xf32>
    %58 = arith.addf %54, %57 : vector<8x256xf32>
    %59 = vector.extract_strided_slice %47 {offsets = [0, 0], sizes = [8, 248], strides = [1, 1]} : vector<8x256xf32> to vector<8x248xf32>
    %60 = tpu.concatenate %36, %59 in 1 : vector<8x8xf32>, vector<8x248xf32> -> vector<8x256xf32>
    %c0_55 = arith.constant 0 : index
    %c0_56 = arith.constant 0 : index
    %61 = vector.load %arg8[%c0_55, %c0_56] : memref<1x256xf32, #tpu.memory_space<vmem>>, vector<1x256xf32>
    %62 = vector.broadcast %61 : vector<1x256xf32> to vector<8x256xf32>
    %63 = arith.mulf %60, %62 : vector<8x256xf32>
    %64 = arith.addf %35, %63 : vector<8x256xf32>
    %65 = vector.extract_strided_slice %58 {offsets = [0, 8], sizes = [8, 248], strides = [1, 1]} : vector<8x256xf32> to vector<8x248xf32>
    %66 = tpu.concatenate %65, %36 in 1 : vector<8x248xf32>, vector<8x8xf32> -> vector<8x256xf32>
    %c0_57 = arith.constant 0 : index
    %c0_58 = arith.constant 0 : index
    %67 = vector.load %arg9[%c0_57, %c0_58] : memref<1x256xf32, #tpu.memory_space<vmem>>, vector<1x256xf32>
    %68 = vector.broadcast %67 : vector<1x256xf32> to vector<8x256xf32>
    %69 = arith.mulf %66, %68 : vector<8x256xf32>
    %70 = arith.addf %64, %69 : vector<8x256xf32>
    %71 = arith.truncf %70 : vector<8x256xf32> to vector<8x256xbf16>
    %c0_59 = arith.constant 0 : index
    %c0_60 = arith.constant 0 : index
    %c0_61 = arith.constant 0 : index
    %72 = vector.load %arg10[%c0_59, %c0_60, %c0_61] : memref<1x8x256xbf16, #tpu.memory_space<vmem>>, vector<1x8x256xbf16>
    %73 = vector.shape_cast %72 : vector<1x8x256xbf16> to vector<8x256xbf16>
    %74 = vector.shape_cast %71 : vector<8x256xbf16> to vector<1x8x256xbf16>
    tpu.vector_store %arg10[%c0_59, %c0_60, %c0_61], %74 {strides = array<i32>} : memref<1x8x256xbf16, #tpu.memory_space<vmem>>, vector<1x8x256xbf16>,
    %cst_62 = arith.constant dense<0.000000e+00> : vector<8xf32>
    %75 = vector.multi_reduction <add>, %70, %cst_62 [1] : vector<8x256xf32> to vector<8xf32>
    %76 = vector.shape_cast %75 : vector<8xf32> to vector<8x1xf32>
    %77 = arith.mulf %70, %70 : vector<8x256xf32>
    %cst_63 = arith.constant dense<0.000000e+00> : vector<8xf32>
    %78 = vector.multi_reduction <add>, %77, %cst_63 [1] : vector<8x256xf32> to vector<8xf32>
    %79 = vector.shape_cast %78 : vector<8xf32> to vector<8x1xf32>
    %80 = tpu.concatenate %76, %79 in 1 : vector<8x1xf32>, vector<8x1xf32> -> vector<8x2xf32>
    %c0_64 = arith.constant 0 : index
    %c0_65 = arith.constant 0 : index
    %c0_66 = arith.constant 0 : index
    %c0_67 = arith.constant 0 : index
    %81 = vector.load %arg11[%c0_64, %c0_65, %c0_66, %c0_67] : memref<1x1x8x2xf32, #tpu.memory_space<vmem>>, vector<1x1x8x2xf32>
    %82 = vector.shape_cast %81 : vector<1x1x8x2xf32> to vector<8x2xf32>
    %83 = vector.shape_cast %80 : vector<8x2xf32> to vector<1x1x8x2xf32>
    tpu.vector_store %arg11[%c0_64, %c0_65, %c0_66, %c0_67], %83 {strides = array<i32>} : memref<1x1x8x2xf32, #tpu.memory_space<vmem>>, vector<1x1x8x2xf32>,
    return
  }
  func.func @transform_0(%arg0: i32, %arg1: i32) -> (i32, i32, i32) {
    %c0_i32 = arith.constant 0 : i32
    %c0_i32_0 = arith.constant 0 : i32
    return %arg0, %c0_i32, %arg1 : i32, i32, i32
  }
  func.func @transform_1(%arg0: i32, %arg1: i32) -> (i32, i32) {
    %c0_i32 = arith.constant 0 : i32
    %c0_i32_0 = arith.constant 0 : i32
    %c0_i32_1 = arith.constant 0 : i32
    return %c0_i32, %c0_i32_0 : i32, i32
  }
  func.func @transform_2(%arg0: i32, %arg1: i32) -> (i32, i32) {
    %c0_i32 = arith.constant 0 : i32
    %c0_i32_0 = arith.constant 0 : i32
    %c0_i32_1 = arith.constant 0 : i32
    return %c0_i32, %c0_i32_0 : i32, i32
  }
  func.func @transform_3(%arg0: i32, %arg1: i32) -> (i32, i32, i32, i32) {
    %c0_i32 = arith.constant 0 : i32
    %c0_i32_0 = arith.constant 0 : i32
    %c0_i32_1 = arith.constant 0 : i32
    %c0_i32_2 = arith.constant 0 : i32
    %c0_i32_3 = arith.constant 0 : i32
    return %c0_i32, %c0_i32_0, %c0_i32_1, %c0_i32_2 : i32, i32, i32, i32
  }
  func.func @transform_4(%arg0: i32, %arg1: i32) -> (i32, i32) {
    %c0_i32 = arith.constant 0 : i32
    %c0_i32_0 = arith.constant 0 : i32
    %c0_i32_1 = arith.constant 0 : i32
    return %c0_i32, %c0_i32_0 : i32, i32
  }
  func.func @transform_5(%arg0: i32, %arg1: i32) -> (i32, i32) {
    %c0_i32 = arith.constant 0 : i32
    %c0_i32_0 = arith.constant 0 : i32
    %c0_i32_1 = arith.constant 0 : i32
    return %c0_i32, %c0_i32_0 : i32, i32
  }
  func.func @transform_6(%arg0: i32, %arg1: i32) -> (i32, i32) {
    %c0_i32 = arith.constant 0 : i32
    %c0_i32_0 = arith.constant 0 : i32
    %c0_i32_1 = arith.constant 0 : i32
    return %c0_i32, %c0_i32_0 : i32, i32
  }
  func.func @transform_7(%arg0: i32, %arg1: i32) -> (i32, i32) {
    %c0_i32 = arith.constant 0 : i32
    %c0_i32_0 = arith.constant 0 : i32
    %c0_i32_1 = arith.constant 0 : i32
    return %c0_i32, %c0_i32_0 : i32, i32
  }
  func.func @transform_8(%arg0: i32, %arg1: i32) -> (i32, i32, i32) {
    %c0_i32 = arith.constant 0 : i32
    %c0_i32_0 = arith.constant 0 : i32
    return %arg0, %c0_i32, %arg1 : i32, i32, i32
  }
  func.func @transform_9(%arg0: i32, %arg1: i32) -> (i32, i32, i32, i32) {
    %c0_i32 = arith.constant 0 : i32
    %c0_i32_0 = arith.constant 0 : i32
    %c0_i32_1 = arith.constant 0 : i32
    return %arg0, %arg1, %c0_i32, %c0_i32_0 : i32, i32, i32, i32
  }
}

module attributes {stable_mosaic.version = 11 : i64} {
  func.func @bn2_gram_kernel(%arg0: i32, %arg1: i32, %arg2: memref<1x8x256xbf16, #tpu.memory_space<vmem>>, %arg3: memref<8x1xf32, #tpu.memory_space<vmem>>, %arg4: memref<8x1xf32, #tpu.memory_space<vmem>>, %arg5: memref<1x1x8x9xf32, #tpu.memory_space<vmem>>) attributes {dimension_semantics = [#tpu.dimension_semantics<parallel>, #tpu.dimension_semantics<parallel>], iteration_bounds = array<i64: 2, 1>, scalar_prefetch = 0 : i64, scratch_operands = 0 : i64, tpu.core_type = #tpu.core_type<tc>, window_params = [{transform_indices = @transform_0, window_bounds = array<i64: 1, 8, 256>}, {pipeline_mode = #tpu.pipeline_mode<synchronous>, transform_indices = @transform_1, window_bounds = array<i64: 8, 1>}, {pipeline_mode = #tpu.pipeline_mode<synchronous>, transform_indices = @transform_2, window_bounds = array<i64: 8, 1>}, {transform_indices = @transform_3, window_bounds = array<i64: 1, 1, 8, 9>}]} {
    %c0 = arith.constant 0 : index
    %c0_0 = arith.constant 0 : index
    %c0_1 = arith.constant 0 : index
    %0 = vector.load %arg2[%c0, %c0_0, %c0_1] : memref<1x8x256xbf16, #tpu.memory_space<vmem>>, vector<1x8x256xbf16>
    %1 = vector.shape_cast %0 : vector<1x8x256xbf16> to vector<8x256xbf16>
    %2 = arith.extf %1 : vector<8x256xbf16> to vector<8x256xf32>
    %c0_2 = arith.constant 0 : index
    %c0_3 = arith.constant 0 : index
    %3 = vector.load %arg3[%c0_2, %c0_3] : memref<8x1xf32, #tpu.memory_space<vmem>>, vector<8x1xf32>
    %4 = vector.broadcast %3 : vector<8x1xf32> to vector<8x256xf32>
    %5 = arith.mulf %2, %4 : vector<8x256xf32>
    %c0_4 = arith.constant 0 : index
    %c0_5 = arith.constant 0 : index
    %6 = vector.load %arg4[%c0_4, %c0_5] : memref<8x1xf32, #tpu.memory_space<vmem>>, vector<8x1xf32>
    %7 = vector.broadcast %6 : vector<8x1xf32> to vector<8x256xf32>
    %8 = arith.addf %5, %7 : vector<8x256xf32>
    %cst = arith.constant 0.000000e+00 : f32
    %9 = vector.broadcast %cst : f32 to vector<8x256xf32>
    %10 = arith.maximumf %8, %9 : vector<8x256xf32>
    %cst_6 = arith.constant dense<0.000000e+00> : vector<8xf32>
    %11 = vector.multi_reduction <add>, %10, %cst_6 [1] : vector<8x256xf32> to vector<8xf32>
    %12 = vector.shape_cast %11 : vector<8xf32> to vector<8x1xf32>
    %13 = tpu.transpose %10, [1, 0] : vector<8x256xf32> -> vector<256x8xf32>
    %cst_7 = arith.constant dense<0.000000e+00> : vector<8x8xf32>
    %14 = tpu.matmul %10, %13, %cst_7 {dimension_numbers = #tpu.dot_dimension_numbers<[1], [0], [0], [1], [0, 0, 1, 1], [], []>} : vector<8x256xf32>, vector<256x8xf32>, vector<8x8xf32> -> vector<8x8xf32>
    %15 = tpu.concatenate %12, %14 in 1 : vector<8x1xf32>, vector<8x8xf32> -> vector<8x9xf32>
    %c0_8 = arith.constant 0 : index
    %c0_9 = arith.constant 0 : index
    %c0_10 = arith.constant 0 : index
    %c0_11 = arith.constant 0 : index
    %16 = vector.load %arg5[%c0_8, %c0_9, %c0_10, %c0_11] : memref<1x1x8x9xf32, #tpu.memory_space<vmem>>, vector<1x1x8x9xf32>
    %17 = vector.shape_cast %16 : vector<1x1x8x9xf32> to vector<8x9xf32>
    %18 = vector.shape_cast %15 : vector<8x9xf32> to vector<1x1x8x9xf32>
    tpu.vector_store %arg5[%c0_8, %c0_9, %c0_10, %c0_11], %18 {strides = array<i32>} : memref<1x1x8x9xf32, #tpu.memory_space<vmem>>, vector<1x1x8x9xf32>,
    return
  }
  func.func @transform_0(%arg0: i32, %arg1: i32) -> (i32, i32, i32) {
    %c0_i32 = arith.constant 0 : i32
    %c0_i32_0 = arith.constant 0 : i32
    return %arg0, %c0_i32, %arg1 : i32, i32, i32
  }
  func.func @transform_1(%arg0: i32, %arg1: i32) -> (i32, i32) {
    %c0_i32 = arith.constant 0 : i32
    %c0_i32_0 = arith.constant 0 : i32
    %c0_i32_1 = arith.constant 0 : i32
    return %c0_i32, %c0_i32_0 : i32, i32
  }
  func.func @transform_2(%arg0: i32, %arg1: i32) -> (i32, i32) {
    %c0_i32 = arith.constant 0 : i32
    %c0_i32_0 = arith.constant 0 : i32
    %c0_i32_1 = arith.constant 0 : i32
    return %c0_i32, %c0_i32_0 : i32, i32
  }
  func.func @transform_3(%arg0: i32, %arg1: i32) -> (i32, i32, i32, i32) {
    %c0_i32 = arith.constant 0 : i32
    %c0_i32_0 = arith.constant 0 : i32
    %c0_i32_1 = arith.constant 0 : i32
    return %arg0, %arg1, %c0_i32, %c0_i32_0 : i32, i32, i32, i32
  }
}

module attributes {stable_mosaic.version = 11 : i64} {
  func.func @bn2_conv3_bn3_res_kernel(%arg0: i32, %arg1: i32, %arg2: memref<1x8x256xbf16, #tpu.memory_space<vmem>>, %arg3: memref<1x32x256xf32, #tpu.memory_space<vmem>>, %arg4: memref<8x1xf32, #tpu.memory_space<vmem>>, %arg5: memref<8x1xf32, #tpu.memory_space<vmem>>, %arg6: memref<32x8xbf16, #tpu.memory_space<vmem>>, %arg7: memref<32x1xf32, #tpu.memory_space<vmem>>, %arg8: memref<32x1xf32, #tpu.memory_space<vmem>>, %arg9: memref<1x32x256xf32, #tpu.memory_space<vmem>>) attributes {dimension_semantics = [#tpu.dimension_semantics<parallel>, #tpu.dimension_semantics<parallel>], iteration_bounds = array<i64: 2, 1>, scalar_prefetch = 0 : i64, scratch_operands = 0 : i64, tpu.core_type = #tpu.core_type<tc>, window_params = [{transform_indices = @transform_0, window_bounds = array<i64: 1, 8, 256>}, {transform_indices = @transform_1, window_bounds = array<i64: 1, 32, 256>}, {pipeline_mode = #tpu.pipeline_mode<synchronous>, transform_indices = @transform_2, window_bounds = array<i64: 8, 1>}, {pipeline_mode = #tpu.pipeline_mode<synchronous>, transform_indices = @transform_3, window_bounds = array<i64: 8, 1>}, {pipeline_mode = #tpu.pipeline_mode<synchronous>, transform_indices = @transform_4, window_bounds = array<i64: 32, 8>}, {pipeline_mode = #tpu.pipeline_mode<synchronous>, transform_indices = @transform_5, window_bounds = array<i64: 32, 1>}, {pipeline_mode = #tpu.pipeline_mode<synchronous>, transform_indices = @transform_6, window_bounds = array<i64: 32, 1>}, {transform_indices = @transform_7, window_bounds = array<i64: 1, 32, 256>}]} {
    %c0 = arith.constant 0 : index
    %c0_0 = arith.constant 0 : index
    %c0_1 = arith.constant 0 : index
    %0 = vector.load %arg2[%c0, %c0_0, %c0_1] : memref<1x8x256xbf16, #tpu.memory_space<vmem>>, vector<1x8x256xbf16>
    %1 = vector.shape_cast %0 : vector<1x8x256xbf16> to vector<8x256xbf16>
    %2 = arith.extf %1 : vector<8x256xbf16> to vector<8x256xf32>
    %c0_2 = arith.constant 0 : index
    %c0_3 = arith.constant 0 : index
    %3 = vector.load %arg4[%c0_2, %c0_3] : memref<8x1xf32, #tpu.memory_space<vmem>>, vector<8x1xf32>
    %4 = vector.broadcast %3 : vector<8x1xf32> to vector<8x256xf32>
    %5 = arith.mulf %2, %4 : vector<8x256xf32>
    %c0_4 = arith.constant 0 : index
    %c0_5 = arith.constant 0 : index
    %6 = vector.load %arg5[%c0_4, %c0_5] : memref<8x1xf32, #tpu.memory_space<vmem>>, vector<8x1xf32>
    %7 = vector.broadcast %6 : vector<8x1xf32> to vector<8x256xf32>
    %8 = arith.addf %5, %7 : vector<8x256xf32>
    %cst = arith.constant 0.000000e+00 : f32
    %9 = vector.broadcast %cst : f32 to vector<8x256xf32>
    %10 = arith.maximumf %8, %9 : vector<8x256xf32>
    %c0_6 = arith.constant 0 : index
    %c0_7 = arith.constant 0 : index
    %11 = vector.load %arg6[%c0_6, %c0_7] : memref<32x8xbf16, #tpu.memory_space<vmem>>, vector<32x8xbf16>
    %12 = arith.truncf %10 : vector<8x256xf32> to vector<8x256xbf16>
    %cst_8 = arith.constant dense<0.000000e+00> : vector<32x256xf32>
    %13 = tpu.matmul %11, %12, %cst_8 {dimension_numbers = #tpu.dot_dimension_numbers<[1], [0], [0], [1], [0, 0, 1, 1], [], []>} : vector<32x8xbf16>, vector<8x256xbf16>, vector<32x256xf32> -> vector<32x256xf32>
    %c0_9 = arith.constant 0 : index
    %c0_10 = arith.constant 0 : index
    %14 = vector.load %arg7[%c0_9, %c0_10] : memref<32x1xf32, #tpu.memory_space<vmem>>, vector<32x1xf32>
    %15 = vector.broadcast %14 : vector<32x1xf32> to vector<32x256xf32>
    %16 = arith.mulf %13, %15 : vector<32x256xf32>
    %c0_11 = arith.constant 0 : index
    %c0_12 = arith.constant 0 : index
    %17 = vector.load %arg8[%c0_11, %c0_12] : memref<32x1xf32, #tpu.memory_space<vmem>>, vector<32x1xf32>
    %18 = vector.broadcast %17 : vector<32x1xf32> to vector<32x256xf32>
    %19 = arith.addf %16, %18 : vector<32x256xf32>
    %c0_13 = arith.constant 0 : index
    %c0_14 = arith.constant 0 : index
    %c0_15 = arith.constant 0 : index
    %20 = vector.load %arg3[%c0_13, %c0_14, %c0_15] : memref<1x32x256xf32, #tpu.memory_space<vmem>>, vector<1x32x256xf32>
    %21 = vector.shape_cast %20 : vector<1x32x256xf32> to vector<32x256xf32>
    %22 = arith.addf %19, %21 : vector<32x256xf32>
    %cst_16 = arith.constant 0.000000e+00 : f32
    %23 = vector.broadcast %cst_16 : f32 to vector<32x256xf32>
    %24 = arith.maximumf %22, %23 : vector<32x256xf32>
    %c0_17 = arith.constant 0 : index
    %c0_18 = arith.constant 0 : index
    %c0_19 = arith.constant 0 : index
    %25 = vector.load %arg9[%c0_17, %c0_18, %c0_19] : memref<1x32x256xf32, #tpu.memory_space<vmem>>, vector<1x32x256xf32>
    %26 = vector.shape_cast %25 : vector<1x32x256xf32> to vector<32x256xf32>
    %27 = vector.shape_cast %24 : vector<32x256xf32> to vector<1x32x256xf32>
    tpu.vector_store %arg9[%c0_17, %c0_18, %c0_19], %27 {strides = array<i32>} : memref<1x32x256xf32, #tpu.memory_space<vmem>>, vector<1x32x256xf32>,
    return
  }
  func.func @transform_0(%arg0: i32, %arg1: i32) -> (i32, i32, i32) {
    %c0_i32 = arith.constant 0 : i32
    %c0_i32_0 = arith.constant 0 : i32
    return %arg0, %c0_i32, %arg1 : i32, i32, i32
  }
  func.func @transform_1(%arg0: i32, %arg1: i32) -> (i32, i32, i32) {
    %c0_i32 = arith.constant 0 : i32
    %c0_i32_0 = arith.constant 0 : i32
    return %arg0, %c0_i32, %arg1 : i32, i32, i32
  }
  func.func @transform_2(%arg0: i32, %arg1: i32) -> (i32, i32) {
    %c0_i32 = arith.constant 0 : i32
    %c0_i32_0 = arith.constant 0 : i32
    %c0_i32_1 = arith.constant 0 : i32
    return %c0_i32, %c0_i32_0 : i32, i32
  }
  func.func @transform_3(%arg0: i32, %arg1: i32) -> (i32, i32) {
    %c0_i32 = arith.constant 0 : i32
    %c0_i32_0 = arith.constant 0 : i32
    %c0_i32_1 = arith.constant 0 : i32
    return %c0_i32, %c0_i32_0 : i32, i32
  }
  func.func @transform_4(%arg0: i32, %arg1: i32) -> (i32, i32) {
    %c0_i32 = arith.constant 0 : i32
    %c0_i32_0 = arith.constant 0 : i32
    %c0_i32_1 = arith.constant 0 : i32
    return %c0_i32, %c0_i32_0 : i32, i32
  }
  func.func @transform_5(%arg0: i32, %arg1: i32) -> (i32, i32) {
    %c0_i32 = arith.constant 0 : i32
    %c0_i32_0 = arith.constant 0 : i32
    %c0_i32_1 = arith.constant 0 : i32
    return %c0_i32, %c0_i32_0 : i32, i32
  }
  func.func @transform_6(%arg0: i32, %arg1: i32) -> (i32, i32) {
    %c0_i32 = arith.constant 0 : i32
    %c0_i32_0 = arith.constant 0 : i32
    %c0_i32_1 = arith.constant 0 : i32
    return %c0_i32, %c0_i32_0 : i32, i32
  }
  func.func @transform_7(%arg0: i32, %arg1: i32) -> (i32, i32, i32) {
    %c0_i32 = arith.constant 0 : i32
    %c0_i32_0 = arith.constant 0 : i32
    return %arg0, %c0_i32, %arg1 : i32, i32, i32
  }
}

</mosaic_0001>

<llo_original>
// kernel: i3d_bottleneck_forward.6
$region0: #{i3d_bottleneck_forward.6}
  #allocation0 [shape = 'u32[]', space=smem, size = 0x4, offset = 0x4, fixed_abs, tag = 'smem constant byte address 0x4 - core index']
  #allocation1 [shape = 'u32[72,128]{1,0:T(1,128)}', space=vmem, size = 0x9000, scoped, tag = 'internal scratch']
  %s0 = inlined_call_operand.vmem [shape: bf16[2,8,256], index: 0, kind: input, shape index: {}]
  %s1 = inlined_call_operand.vmem [shape: f32[8,1], index: 1, kind: input, shape index: {}]
  %s2 = inlined_call_operand.vmem [shape: f32[8,1], index: 2, kind: input, shape index: {}]
  %s3 = inlined_call_operand.vmem [shape: f32[2,1,8,9], index: 3, kind: output, shape index: {}]
  %s4 = sld [smem:[#allocation0]]
  $region45: #{i3d_bottleneck_forward.6} parent=0
    _
  %s6 = ssub.s32 1, %s4
  %s7 = scalar_select 0, %s6, %s4
  loop: start=0, step=1, limit=4
  $region2: #{i3d_bottleneck_forward.6} parent=0 // loop_pre_header
    _
  $region3: #{i3d_bottleneck_forward.6} parent=0 // loop_header
    %s9 = sphi 0, %s13
    %p10 = scmp.ge.s32.totalorder %s9, 4
    %s16 = sphi 0, %s28
    %s17 = sphi 0, %s24
    %s18 = sphi 0, %s16
    %s19 = sphi 0, %s17
    %s20 = sphi 0, %s18
    %s21 = sphi 0, %s19
    %s33 = sphi 0, %s35
    %s36 = sphi 0, %s33
    %s37 = sphi 0, %s36
    %s53 = sphi 0, %s37
    %s57 = sphi 0, %s57
    %s59 = sphi 0, %s57
    %s60 = sphi 0, %s59
    %s74 = sphi 0, %s60
    %s78 = sphi 0, %s78
    %s80 = sphi 0, %s78
    %s81 = sphi 0, %s80
    %s95 = sphi 0, %s81
    %s103 = sphi 0, %s105
    %s106 = sphi 0, %s103
    %s107 = sphi 0, %s106
    %s123 = sphi 0, %s107
  $region4: #{i3d_bottleneck_forward.6} parent=0 // loop_header_branch
    %12 = sbr.rel (%p10) target = $region8
  $region5: #{i3d_bottleneck_forward.6} parent=0 // loop_body
    %s14 = ssub.s32 %s9, 1
    %s15 = ssub.s32 %s9, 2
    %s22 = sadd.s32 1, %s17
    %p23 = scmp.ge.s32.totalorder %s22, 1
    %s24 = scalar_select %p23, 0, %s22
    %s25 = sadd.s32 1, %s16
    %s26 = scalar_select %p23, %s25, %s16
    %p27 = scmp.ge.s32.totalorder %s26, 2
    %s28 = scalar_select %p27, 0, %s26
    %s29 = ssub.s32 %s16, %s28
    %s30 = ssub.s32 %s17, %s24
    %s31 = sor.u32 %s29, %s30
    %p32 = scmp.eq.s32.totalorder %s31, 0
    %s34 = sadd.s32 %s33, 1
    %s35 = scalar_select %p32, %s33, %s34
    %p38 = pneg %p32
    %p39 = scmp.eq.s32.totalorder %s9, 1
    %p40 = por %p38, %p39
    %p41 = scmp.ne.s32.totalorder %s33, %s36
    %p42 = scmp.eq.s32.totalorder %s9, 0
    %p43 = por %p41, %p42
    %p44 = scmp.ne.s32.totalorder %s33, %s36
    %p45 = scmp.eq.s32.totalorder %s14, 1
    %p46 = por %p44, %p45
    %p47 = scmp.ne.s32.totalorder %s36, %s37
    %p48 = scmp.eq.s32.totalorder %s14, 0
    %p49 = por %p47, %p48
    %p50 = scmp.ne.s32.totalorder %s36, %s37
    %p51 = scmp.eq.s32.totalorder %s15, 1
    %p52 = por %p50, %p51
    %p54 = scmp.ne.s32.totalorder %s37, %s53
    %p55 = scmp.eq.s32.totalorder %s15, 0
    %p56 = por %p54, %p55
    %s58 = sadd.s32 %s57, 1
    %p61 = scmp.eq.s32.totalorder %s9, 1
    %p62 = scmp.ne.s32.totalorder %s57, %s59
    %p63 = scmp.eq.s32.totalorder %s9, 0
    %p64 = por %p62, %p63
    %p65 = scmp.ne.s32.totalorder %s57, %s59
    %p66 = scmp.eq.s32.totalorder %s14, 1
    %p67 = por %p65, %p66
    %p68 = scmp.ne.s32.totalorder %s59, %s60
    %p69 = scmp.eq.s32.totalorder %s14, 0
    %p70 = por %p68, %p69
    %p71 = scmp.ne.s32.totalorder %s59, %s60
    %p72 = scmp.eq.s32.totalorder %s15, 1
    %p73 = por %p71, %p72
    %p75 = scmp.ne.s32.totalorder %s60, %s74
    %p76 = scmp.eq.s32.totalorder %s15, 0
    %p77 = por %p75, %p76
    %s79 = sadd.s32 %s78, 1
    %p82 = scmp.eq.s32.totalorder %s9, 1
    %p83 = scmp.ne.s32.totalorder %s78, %s80
    %p84 = scmp.eq.s32.totalorder %s9, 0
    %p85 = por %p83, %p84
    %p86 = scmp.ne.s32.totalorder %s78, %s80
    %p87 = scmp.eq.s32.totalorder %s14, 1
    %p88 = por %p86, %p87
    %p89 = scmp.ne.s32.totalorder %s80, %s81
    %p90 = scmp.eq.s32.totalorder %s14, 0
    %p91 = por %p89, %p90
    %p92 = scmp.ne.s32.totalorder %s80, %s81
    %p93 = scmp.eq.s32.totalorder %s15, 1
    %p94 = por %p92, %p93
    %p96 = scmp.ne.s32.totalorder %s81, %s95
    %p97 = scmp.eq.s32.totalorder %s15, 0
    %p98 = por %p96, %p97
    %s99 = ssub.s32 %s16, %s28
    %s100 = ssub.s32 %s17, %s24
    %s101 = sor.u32 %s99, %s100
    %p102 = scmp.eq.s32.totalorder %s101, 0
    %s104 = sadd.s32 %s103, 1
    %s105 = scalar_select %p102, %s103, %s104
    %p108 = pneg %p102
    %p109 = scmp.eq.s32.totalorder %s9, 1
    %p110 = por %p108, %p109
    %p111 = scmp.ne.s32.totalorder %s103, %s106
    %p112 = scmp.eq.s32.totalorder %s9, 0
    %p113 = por %p111, %p112
    %p114 = scmp.ne.s32.totalorder %s103, %s106
    %p115 = scmp.eq.s32.totalorder %s14, 1
    %p116 = por %p114, %p115
    %p117 = scmp.ne.s32.totalorder %s106, %s107
    %p118 = scmp.eq.s32.totalorder %s14, 0
    %p119 = por %p117, %p118
    %p120 = scmp.ne.s32.totalorder %s106, %s107
    %p121 = scmp.eq.s32.totalorder %s15, 1
    %p122 = por %p120, %p121
    %p124 = scmp.ne.s32.totalorder %s107, %s123
    %p125 = scmp.eq.s32.totalorder %s15, 0
    %p126 = por %p124, %p125
    %p127 = scmp.le.s32.totalorder 1, %s9
    %p128 = scmp.lt.s32.totalorder %s9, 3
    %p129 = pnand %p127, %p128
    %p130 = pneg %p129
    // Predicated region
    $region9: #{i3d_bottleneck_forward.6} parent=5 // pred_check
      _
    $region10: #{i3d_bottleneck_forward.6} parent=5 // pred_check_branch
      %132 = sbr.rel (%p129) target = $region12
    $region11: #{i3d_bottleneck_forward.6} parent=5 // pred_region
      %s133 = ssub.s32 %s9, 1
      // Predicated region
      $region13: #{i3d_bottleneck_forward.6} parent=11 // pred_check
        %p134 = pneg %p70
      $region14: #{i3d_bottleneck_forward.6} parent=11 // pred_check_branch
        %136 = sbr.rel (%p134) target = $region16
      $region15: #{i3d_bottleneck_forward.6} parent=11 // pred_region
        _
      $region16: #{i3d_bottleneck_forward.6} parent=11 // pred_fallthru
        _
      // Predicated region
      $region17: #{i3d_bottleneck_forward.6} parent=11 // pred_check
        %p137 = pneg %p91
      $region18: #{i3d_bottleneck_forward.6} parent=11 // pred_check_branch
        %139 = sbr.rel (%p137) target = $region20
      $region19: #{i3d_bottleneck_forward.6} parent=11 // pred_region
        _
      $region20: #{i3d_bottleneck_forward.6} parent=11 // pred_fallthru
        _
    $region12: #{i3d_bottleneck_forward.6} parent=5 // pred_fallthru
      _
    %p140 = scmp.lt.s32.totalorder %s9, 2
    // Predicated region
    $region21: #{i3d_bottleneck_forward.6} parent=5 // pred_check
      %p141 = pneg %p140
    $region22: #{i3d_bottleneck_forward.6} parent=5 // pred_check_branch
      %143 = sbr.rel (%p141) target = $region24
    $region23: #{i3d_bottleneck_forward.6} parent=5 // pred_region
      // Predicated region
      $region25: #{i3d_bottleneck_forward.6} parent=23 // pred_check
        %p144 = pneg %p43
      $region26: #{i3d_bottleneck_forward.6} parent=23 // pred_check_branch
        %146 = sbr.rel (%p144) target = $region28
      $region27: #{i3d_bottleneck_forward.6} parent=23 // pred_region
        %s147 = smul.u32 2, %s17
        %p148 = scmp.lt.s32.totalorder %s16, 1
        %s149 = scalar_select %p148, %s16, 1
        %p150 = scmp.lt.s32.totalorder %s147, 1
        %s151 = scalar_select %p150, %s147, 1
        %s152 = smul.addr %s149, 2
        %s153 = sadd.s32 %s151, %s152
        %s154 = smul.addr %s153, 4
        %s155 = scalar_lea.vmem %s0, %s154
        %s156 = smul.u32 2, %s17
      $region28: #{i3d_bottleneck_forward.6} parent=23 // pred_fallthru
        _
    $region24: #{i3d_bottleneck_forward.6} parent=5 // pred_fallthru
      _
    %p157 = scmp.le.s32.totalorder 1, %s9
    %p158 = scmp.lt.s32.totalorder %s9, 3
    %p159 = pnand %p157, %p158
    %p160 = pneg %p159
    // Predicated region
    $region29: #{i3d_bottleneck_forward.6} parent=5 // pred_check
      _
    $region30: #{i3d_bottleneck_forward.6} parent=5 // pred_check_branch
      %162 = sbr.rel (%p159) target = $region32
    $region31: #{i3d_bottleneck_forward.6} parent=5 // pred_region
      %s163 = ssub.s32 %s9, 1
      %s164 = smul.u32 2, %s19
      %p165 = scmp.lt.s32.totalorder %s18, 1
      %s166 = scalar_select %p165, %s18, 1
      %p167 = scmp.lt.s32.totalorder %s164, 1
      %s168 = scalar_select %p167, %s164, 1
      %s169 = smul.addr %s166, 2
      %s170 = sadd.s32 %s168, %s169
      %s171 = smul.addr %s170, 4
      %s172 = scalar_lea.vmem %s0, %s171
      %p173 = pneg %p49
      %p174 = pneg %p46
      %p175 = pneg %p70
      %p176 = pneg %p67
      %p177 = pneg %p91
      %p178 = pneg %p88
      %p179 = pneg %p119
      %p180 = pneg %p116
      %p181 = scmp.lt.s32.totalorder %s18, 1
      %s182 = scalar_select %p181, %s18, 1
      %p183 = scmp.lt.s32.totalorder %s19, 0
      %s184 = scalar_select %p183, %s19, 0
      %s185 = sadd.s32 %s184, %s182
      %s186 = smul.addr %s185, 8
      %s187 = scalar_lea.vmem %s3, %s186
      %s188 = smul.u32 2, %s19
      %p189 = scmp.lt.s32.totalorder %s18, 1
      %s190 = scalar_select %p189, %s18, 1
      %p191 = scmp.lt.s32.totalorder %s188, 1
      %s192 = scalar_select %p191, %s188, 1
      %s193 = smul.addr %s190, 2
      %s194 = sadd.s32 %s192, %s193
      %s195 = smul.addr %s194, 4
      %s196 = scalar_lea.vmem %s0, %s195
      %s197 = smul.u32 2, %s19
      %p198 = scmp.lt.s32.totalorder %s18, 1
      %s199 = scalar_select %p198, %s18, 1
      %p200 = scmp.lt.s32.totalorder %s19, 0
      %s201 = scalar_select %p200, %s19, 0
      %s202 = sadd.s32 %s201, %s199
      %s203 = smul.addr %s202, 8
      %s204 = scalar_lea.vmem %s3, %s203
      %v205 = vld [vmem:[%s196] sm:$0xff]
      %v206 = vunpack.c.l.bf16 %v205
      %v207 = vunpack.c.h.bf16 %v205
      %v208 = vld [vmem:[%s1] sm:$0xff]
      %210 = vset.pattern.permute.xlu0 0
      %211 = vperm.xlu0 %210, %v208
      %v212 = vpop.permute.xlu0 %211
      %v214 = vmul.f32 %v206, %v212
      %v215 = vmul.f32 %v207, %v212
      %v216 = vld [vmem:[%s2] sm:$0xff]
      %218 = vset.pattern.permute.xlu0 0
      %219 = vperm.xlu0 %218, %v216
      %v220 = vpop.permute.xlu0 %219
      %v222 = vadd.f32 %v214, %v220
      %v223 = vadd.f32 %v215, %v220
      %v224 = vmax.f32 %v222, 0.0
      %v225 = vmax.f32 %v223, 0.0
      %v226 = vadd.f32 %v224, %v225
      %227 = vadd.xlane.f32.xlu0 %v226
      %v228 = vpop.xlane.xlu0 %227
      %229 = vmatpush.xpose.msra.mxu0 0.0
      %230 = vmatpush.xpose.msra.mxu0 0.0
      %231 = vmatpush.xpose.msra.mxu0 0.0
      %232 = vmatpush.xpose.msra.mxu0 0.0
      %233 = vmatpush.xpose.msra.mxu0 0.0
      %234 = vmatpush.xpose.msra.mxu0 0.0
      %235 = vmatpush.xpose.msra.mxu0 0.0
      %236 = vmatpush.xpose.msra.mxu0 0.0
      %237 = vmatpush.xpose.msra.mxu0 0.0
      %238 = vmatpush.xpose.msra.mxu0 0.0
      %239 = vmatpush.xpose.msra.mxu0 0.0
      %240 = vmatpush.xpose.msra.mxu0 0.0
      %241 = vmatpush.xpose.msra.mxu0 0.0
      %242 = vmatpush.xpose.msra.mxu0 0.0
      %243 = vmatpush.xpose.msra.mxu0 0.0
      %244 = vmatpush.xpose.msra.mxu0 %v224
      %245 = vmatmul.f32.gmra.mxu0 %v224
      %v246 = vpop.f32.mrf.mxu0
      %v247 = vadd.f32 0.0, %v246
      %248 = vdwg.mxu0
      %249 = vmatpush.xpose.msra.mxu0 0.0
      %250 = vmatpush.xpose.msra.mxu0 0.0
      %251 = vmatpush.xpose.msra.mxu0 0.0
      %252 = vmatpush.xpose.msra.mxu0 0.0
      %253 = vmatpush.xpose.msra.mxu0 0.0
      %254 = vmatpush.xpose.msra.mxu0 0.0
      %255 = vmatpush.xpose.msra.mxu0 0.0
      %256 = vmatpush.xpose.msra.mxu0 0.0
      %257 = vmatpush.xpose.msra.mxu0 0.0
      %258 = vmatpush.xpose.msra.mxu0 0.0
      %259 = vmatpush.xpose.msra.mxu0 0.0
      %260 = vmatpush.xpose.msra.mxu0 0.0
      %261 = vmatpush.xpose.msra.mxu0 0.0
      %262 = vmatpush.xpose.msra.mxu0 0.0
      %263 = vmatpush.xpose.msra.mxu0 0.0
      %264 = vmatpush.xpose.msra.mxu0 %v225
      %265 = vmatmul.f32.gmra.mxu0 %v225
      %v266 = vpop.f32.mrf.mxu0
      %v267 = vadd.f32 %v247, %v266
      %268 = vdwg.mxu0
      %270 = vrot.lane.b32.xlu0 %v267, 1
      %v271 = vpop.permute.xlu0 %270
      %vm273 = vcmask 7168
      %v274 = vsel %vm273, %v228, %v271
      %vm275 = vcmask 72704
      %276 = vst.msk [vmem:[%s204] sm:$0xff] %vm275, %v274
      %p277 = scmp.lt.s32.totalorder %s18, 1
      %s278 = scalar_select %p277, %s18, 1
      %p279 = scmp.lt.s32.totalorder %s19, 0
      %s280 = scalar_select %p279, %s19, 0
      %s281 = sadd.s32 %s280, %s278
      %s282 = smul.addr %s281, 8
      %s283 = scalar_lea.vmem %s3, %s282
      // Predicated region
      $region33: #{i3d_bottleneck_forward.6} parent=31 // pred_check
        %p284 = pneg %p116
      $region34: #{i3d_bottleneck_forward.6} parent=31 // pred_check_branch
        %286 = sbr.rel (%p284) target = $region36
      $region35: #{i3d_bottleneck_forward.6} parent=31 // pred_region
        _
      $region36: #{i3d_bottleneck_forward.6} parent=31 // pred_fallthru
        _
    $region32: #{i3d_bottleneck_forward.6} parent=5 // pred_fallthru
      _
    %p287 = scmp.le.s32.totalorder 2, %s9
    // Predicated region
    $region37: #{i3d_bottleneck_forward.6} parent=5 // pred_check
      %p288 = pneg %p287
    $region38: #{i3d_bottleneck_forward.6} parent=5 // pred_check_branch
      %290 = sbr.rel (%p288) target = $region40
    $region39: #{i3d_bottleneck_forward.6} parent=5 // pred_region
      %s291 = ssub.s32 %s9, 2
      // Predicated region
      $region41: #{i3d_bottleneck_forward.6} parent=39 // pred_check
        %p292 = pneg %p122
      $region42: #{i3d_bottleneck_forward.6} parent=39 // pred_check_branch
        %294 = sbr.rel (%p292) target = $region44
      $region43: #{i3d_bottleneck_forward.6} parent=39 // pred_region
        %p295 = scmp.lt.s32.totalorder %s20, 1
        %s296 = scalar_select %p295, %s20, 1
        %p297 = scmp.lt.s32.totalorder %s21, 0
        %s298 = scalar_select %p297, %s21, 0
        %s299 = sadd.s32 %s298, %s296
        %s300 = smul.addr %s299, 8
        %s301 = scalar_lea.vmem %s3, %s300
      $region44: #{i3d_bottleneck_forward.6} parent=39 // pred_fallthru
        _
    $region40: #{i3d_bottleneck_forward.6} parent=5 // pred_fallthru
      _
  $region6: #{i3d_bottleneck_forward.6} parent=0 // loop_footer
    %s13 = sadd.s32 1, %s9
  $region7: #{i3d_bottleneck_forward.6} parent=0 // loop_footer_branch
    %8 = sbr.rel target = $region3
  $region8: #{i3d_bottleneck_forward.6} parent=0 // loop_exit
    _

// kernel: i3d_bottleneck_forward.5
$region0: #{i3d_bottleneck_forward.5}
  #allocation0 [shape = 'u32[]', space=smem, size = 0x4, offset = 0x4, fixed_abs, tag = 'smem constant byte address 0x4 - core index']
  #allocation1 [shape = 'u32[72,128]{1,0:T(1,128)}', space=vmem, size = 0x9000, scoped, tag = 'internal scratch']
  %s0 = inlined_call_operand.vmem [shape: bf16[2,8,256], index: 0, kind: input, shape index: {}]
  %s1 = inlined_call_operand.vmem [shape: f32[8,1], index: 1, kind: input, shape index: {}]
  %s2 = inlined_call_operand.vmem [shape: f32[8,1], index: 2, kind: input, shape index: {}]
  %s3 = inlined_call_operand.vmem [shape: bf16[3,3,8,8], index: 3, kind: input, shape index: {}]
  %s4 = inlined_call_operand.vmem [shape: f32[1,256], index: 4, kind: input, shape index: {}]
  %s5 = inlined_call_operand.vmem [shape: f32[1,256], index: 5, kind: input, shape index: {}]
  %s6 = inlined_call_operand.vmem [shape: f32[1,256], index: 6, kind: input, shape index: {}]
  %s7 = inlined_call_operand.vmem [shape: f32[1,256], index: 7, kind: input, shape index: {}]
  %s8 = inlined_call_operand.vmem [shape: bf16[2,8,256], index: 8, kind: output, shape index: {0}]
  %s9 = inlined_call_operand.vmem [shape: f32[2,1,8,2], index: 9, kind: output, shape index: {1}]
  %10 = xla_tuple %s8, %s9
  %s11 = sld [smem:[#allocation0]]
  $region73: #{i3d_bottleneck_forward.5} parent=0
    _
  %s13 = ssub.s32 1, %s11
  %s14 = scalar_select 0, %s13, %s11
  loop: start=0, step=1, limit=4
  $region2: #{i3d_bottleneck_forward.5} parent=0 // loop_pre_header
    _
  $region3: #{i3d_bottleneck_forward.5} parent=0 // loop_header
    %s16 = sphi 0, %s20
    %p17 = scmp.ge.s32.totalorder %s16, 4
    %s23 = sphi 0, %s35
    %s24 = sphi 0, %s31
    %s25 = sphi 0, %s23
    %s26 = sphi 0, %s24
    %s27 = sphi 0, %s25
    %s28 = sphi 0, %s26
    %s40 = sphi 0, %s42
    %s43 = sphi 0, %s40
    %s44 = sphi 0, %s43
    %s60 = sphi 0, %s44
    %s64 = sphi 0, %s64
    %s66 = sphi 0, %s64
    %s67 = sphi 0, %s66
    %s81 = sphi 0, %s67
    %s85 = sphi 0, %s85
    %s87 = sphi 0, %s85
    %s88 = sphi 0, %s87
    %s102 = sphi 0, %s88
    %s106 = sphi 0, %s106
    %s108 = sphi 0, %s106
    %s109 = sphi 0, %s108
    %s123 = sphi 0, %s109
    %s127 = sphi 0, %s127
    %s129 = sphi 0, %s127
    %s130 = sphi 0, %s129
    %s144 = sphi 0, %s130
    %s148 = sphi 0, %s148
    %s150 = sphi 0, %s148
    %s151 = sphi 0, %s150
    %s165 = sphi 0, %s151
    %s169 = sphi 0, %s169
    %s171 = sphi 0, %s169
    %s172 = sphi 0, %s171
    %s186 = sphi 0, %s172
    %s190 = sphi 0, %s190
    %s192 = sphi 0, %s190
    %s193 = sphi 0, %s192
    %s207 = sphi 0, %s193
    %s215 = sphi 0, %s217
    %s218 = sphi 0, %s215
    %s219 = sphi 0, %s218
    %s235 = sphi 0, %s219
    %s243 = sphi 0, %s245
    %s246 = sphi 0, %s243
    %s247 = sphi 0, %s246
    %s263 = sphi 0, %s247
  $region4: #{i3d_bottleneck_forward.5} parent=0 // loop_header_branch
    %19 = sbr.rel (%p17) target = $region8
  $region5: #{i3d_bottleneck_forward.5} parent=0 // loop_body
    %s21 = ssub.s32 %s16, 1
    %s22 = ssub.s32 %s16, 2
    %s29 = sadd.s32 1, %s24
    %p30 = scmp.ge.s32.totalorder %s29, 1
    %s31 = scalar_select %p30, 0, %s29
    %s32 = sadd.s32 1, %s23
    %s33 = scalar_select %p30, %s32, %s23
    %p34 = scmp.ge.s32.totalorder %s33, 2
    %s35 = scalar_select %p34, 0, %s33
    %s36 = ssub.s32 %s23, %s35
    %s37 = ssub.s32 %s24, %s31
    %s38 = sor.u32 %s36, %s37
    %p39 = scmp.eq.s32.totalorder %s38, 0
    %s41 = sadd.s32 %s40, 1
    %s42 = scalar_select %p39, %s40, %s41
    %p45 = pneg %p39
    %p46 = scmp.eq.s32.totalorder %s16, 1
    %p47 = por %p45, %p46
    %p48 = scmp.ne.s32.totalorder %s40, %s43
    %p49 = scmp.eq.s32.totalorder %s16, 0
    %p50 = por %p48, %p49
    %p51 = scmp.ne.s32.totalorder %s40, %s43
    %p52 = scmp.eq.s32.totalorder %s21, 1
    %p53 = por %p51, %p52
    %p54 = scmp.ne.s32.totalorder %s43, %s44
    %p55 = scmp.eq.s32.totalorder %s21, 0
    %p56 = por %p54, %p55
    %p57 = scmp.ne.s32.totalorder %s43, %s44
    %p58 = scmp.eq.s32.totalorder %s22, 1
    %p59 = por %p57, %p58
    %p61 = scmp.ne.s32.totalorder %s44, %s60
    %p62 = scmp.eq.s32.totalorder %s22, 0
    %p63 = por %p61, %p62
    %s65 = sadd.s32 %s64, 1
    %p68 = scmp.eq.s32.totalorder %s16, 1
    %p69 = scmp.ne.s32.totalorder %s64, %s66
    %p70 = scmp.eq.s32.totalorder %s16, 0
    %p71 = por %p69, %p70
    %p72 = scmp.ne.s32.totalorder %s64, %s66
    %p73 = scmp.eq.s32.totalorder %s21, 1
    %p74 = por %p72, %p73
    %p75 = scmp.ne.s32.totalorder %s66, %s67
    %p76 = scmp.eq.s32.totalorder %s21, 0
    %p77 = por %p75, %p76
    %p78 = scmp.ne.s32.totalorder %s66, %s67
    %p79 = scmp.eq.s32.totalorder %s22, 1
    %p80 = por %p78, %p79
    %p82 = scmp.ne.s32.totalorder %s67, %s81
    %p83 = scmp.eq.s32.totalorder %s22, 0
    %p84 = por %p82, %p83
    %s86 = sadd.s32 %s85, 1
    %p89 = scmp.eq.s32.totalorder %s16, 1
    %p90 = scmp.ne.s32.totalorder %s85, %s87
    %p91 = scmp.eq.s32.totalorder %s16, 0
    %p92 = por %p90, %p91
    %p93 = scmp.ne.s32.totalorder %s85, %s87
    %p94 = scmp.eq.s32.totalorder %s21, 1
    %p95 = por %p93, %p94
    %p96 = scmp.ne.s32.totalorder %s87, %s88
    %p97 = scmp.eq.s32.totalorder %s21, 0
    %p98 = por %p96, %p97
    %p99 = scmp.ne.s32.totalorder %s87, %s88
    %p100 = scmp.eq.s32.totalorder %s22, 1
    %p101 = por %p99, %p100
    %p103 = scmp.ne.s32.totalorder %s88, %s102
    %p104 = scmp.eq.s32.totalorder %s22, 0
    %p105 = por %p103, %p104
    %s107 = sadd.s32 %s106, 1
    %p110 = scmp.eq.s32.totalorder %s16, 1
    %p111 = scmp.ne.s32.totalorder %s106, %s108
    %p112 = scmp.eq.s32.totalorder %s16, 0
    %p113 = por %p111, %p112
    %p114 = scmp.ne.s32.totalorder %s106, %s108
    %p115 = scmp.eq.s32.totalorder %s21, 1
    %p116 = por %p114, %p115
    %p117 = scmp.ne.s32.totalorder %s108, %s109
    %p118 = scmp.eq.s32.totalorder %s21, 0
    %p119 = por %p117, %p118
    %p120 = scmp.ne.s32.totalorder %s108, %s109
    %p121 = scmp.eq.s32.totalorder %s22, 1
    %p122 = por %p120, %p121
    %p124 = scmp.ne.s32.totalorder %s109, %s123
    %p125 = scmp.eq.s32.totalorder %s22, 0
    %p126 = por %p124, %p125
    %s128 = sadd.s32 %s127, 1
    %p131 = scmp.eq.s32.totalorder %s16, 1
    %p132 = scmp.ne.s32.totalorder %s127, %s129
    %p133 = scmp.eq.s32.totalorder %s16, 0
    %p134 = por %p132, %p133
    %p135 = scmp.ne.s32.totalorder %s127, %s129
    %p136 = scmp.eq.s32.totalorder %s21, 1
    %p137 = por %p135, %p136
    %p138 = scmp.ne.s32.totalorder %s129, %s130
    %p139 = scmp.eq.s32.totalorder %s21, 0
    %p140 = por %p138, %p139
    %p141 = scmp.ne.s32.totalorder %s129, %s130
    %p142 = scmp.eq.s32.totalorder %s22, 1
    %p143 = por %p141, %p142
    %p145 = scmp.ne.s32.totalorder %s130, %s144
    %p146 = scmp.eq.s32.totalorder %s22, 0
    %p147 = por %p145, %p146
    %s149 = sadd.s32 %s148, 1
    %p152 = scmp.eq.s32.totalorder %s16, 1
    %p153 = scmp.ne.s32.totalorder %s148, %s150
    %p154 = scmp.eq.s32.totalorder %s16, 0
    %p155 = por %p153, %p154
    %p156 = scmp.ne.s32.totalorder %s148, %s150
    %p157 = scmp.eq.s32.totalorder %s21, 1
    %p158 = por %p156, %p157
    %p159 = scmp.ne.s32.totalorder %s150, %s151
    %p160 = scmp.eq.s32.totalorder %s21, 0
    %p161 = por %p159, %p160
    %p162 = scmp.ne.s32.totalorder %s150, %s151
    %p163 = scmp.eq.s32.totalorder %s22, 1
    %p164 = por %p162, %p163
    %p166 = scmp.ne.s32.totalorder %s151, %s165
    %p167 = scmp.eq.s32.totalorder %s22, 0
    %p168 = por %p166, %p167
    %s170 = sadd.s32 %s169, 1
    %p173 = scmp.eq.s32.totalorder %s16, 1
    %p174 = scmp.ne.s32.totalorder %s169, %s171
    %p175 = scmp.eq.s32.totalorder %s16, 0
    %p176 = por %p174, %p175
    %p177 = scmp.ne.s32.totalorder %s169, %s171
    %p178 = scmp.eq.s32.totalorder %s21, 1
    %p179 = por %p177, %p178
    %p180 = scmp.ne.s32.totalorder %s171, %s172
    %p181 = scmp.eq.s32.totalorder %s21, 0
    %p182 = por %p180, %p181
    %p183 = scmp.ne.s32.totalorder %s171, %s172
    %p184 = scmp.eq.s32.totalorder %s22, 1
    %p185 = por %p183, %p184
    %p187 = scmp.ne.s32.totalorder %s172, %s186
    %p188 = scmp.eq.s32.totalorder %s22, 0
    %p189 = por %p187, %p188
    %s191 = sadd.s32 %s190, 1
    %p194 = scmp.eq.s32.totalorder %s16, 1
    %p195 = scmp.ne.s32.totalorder %s190, %s192
    %p196 = scmp.eq.s32.totalorder %s16, 0
    %p197 = por %p195, %p196
    %p198 = scmp.ne.s32.totalorder %s190, %s192
    %p199 = scmp.eq.s32.totalorder %s21, 1
    %p200 = por %p198, %p199
    %p201 = scmp.ne.s32.totalorder %s192, %s193
    %p202 = scmp.eq.s32.totalorder %s21, 0
    %p203 = por %p201, %p202
    %p204 = scmp.ne.s32.totalorder %s192, %s193
    %p205 = scmp.eq.s32.totalorder %s22, 1
    %p206 = por %p204, %p205
    %p208 = scmp.ne.s32.totalorder %s193, %s207
    %p209 = scmp.eq.s32.totalorder %s22, 0
    %p210 = por %p208, %p209
    %s211 = ssub.s32 %s23, %s35
    %s212 = ssub.s32 %s24, %s31
    %s213 = sor.u32 %s211, %s212
    %p214 = scmp.eq.s32.totalorder %s213, 0
    %s216 = sadd.s32 %s215, 1
    %s217 = scalar_select %p214, %s215, %s216
    %p220 = pneg %p214
    %p221 = scmp.eq.s32.totalorder %s16, 1
    %p222 = por %p220, %p221
    %p223 = scmp.ne.s32.totalorder %s215, %s218
    %p224 = scmp.eq.s32.totalorder %s16, 0
    %p225 = por %p223, %p224
    %p226 = scmp.ne.s32.totalorder %s215, %s218
    %p227 = scmp.eq.s32.totalorder %s21, 1
    %p228 = por %p226, %p227
    %p229 = scmp.ne.s32.totalorder %s218, %s219
    %p230 = scmp.eq.s32.totalorder %s21, 0
    %p231 = por %p229, %p230
    %p232 = scmp.ne.s32.totalorder %s218, %s219
    %p233 = scmp.eq.s32.totalorder %s22, 1
    %p234 = por %p232, %p233
    %p236 = scmp.ne.s32.totalorder %s219, %s235
    %p237 = scmp.eq.s32.totalorder %s22, 0
    %p238 = por %p236, %p237
    %s239 = ssub.s32 %s23, %s35
    %s240 = ssub.s32 %s24, %s31
    %s241 = sor.u32 %s239, %s240
    %p242 = scmp.eq.s32.totalorder %s241, 0
    %s244 = sadd.s32 %s243, 1
    %s245 = scalar_select %p242, %s243, %s244
    %p248 = pneg %p242
    %p249 = scmp.eq.s32.totalorder %s16, 1
    %p250 = por %p248, %p249
    %p251 = scmp.ne.s32.totalorder %s243, %s246
    %p252 = scmp.eq.s32.totalorder %s16, 0
    %p253 = por %p251, %p252
    %p254 = scmp.ne.s32.totalorder %s243, %s246
    %p255 = scmp.eq.s32.totalorder %s21, 1
    %p256 = por %p254, %p255
    %p257 = scmp.ne.s32.totalorder %s246, %s247
    %p258 = scmp.eq.s32.totalorder %s21, 0
    %p259 = por %p257, %p258
    %p260 = scmp.ne.s32.totalorder %s246, %s247
    %p261 = scmp.eq.s32.totalorder %s22, 1
    %p262 = por %p260, %p261
    %p264 = scmp.ne.s32.totalorder %s247, %s263
    %p265 = scmp.eq.s32.totalorder %s22, 0
    %p266 = por %p264, %p265
    %p267 = scmp.le.s32.totalorder 1, %s16
    %p268 = scmp.lt.s32.totalorder %s16, 3
    %p269 = pnand %p267, %p268
    %p270 = pneg %p269
    // Predicated region
    $region9: #{i3d_bottleneck_forward.5} parent=5 // pred_check
      _
    $region10: #{i3d_bottleneck_forward.5} parent=5 // pred_check_branch
      %272 = sbr.rel (%p269) target = $region12
    $region11: #{i3d_bottleneck_forward.5} parent=5 // pred_region
      %s273 = ssub.s32 %s16, 1
      // Predicated region
      $region13: #{i3d_bottleneck_forward.5} parent=11 // pred_check
        %p274 = pneg %p77
      $region14: #{i3d_bottleneck_forward.5} parent=11 // pred_check_branch
        %276 = sbr.rel (%p274) target = $region16
      $region15: #{i3d_bottleneck_forward.5} parent=11 // pred_region
        _
      $region16: #{i3d_bottleneck_forward.5} parent=11 // pred_fallthru
        _
      // Predicated region
      $region17: #{i3d_bottleneck_forward.5} parent=11 // pred_check
        %p277 = pneg %p98
      $region18: #{i3d_bottleneck_forward.5} parent=11 // pred_check_branch
        %279 = sbr.rel (%p277) target = $region20
      $region19: #{i3d_bottleneck_forward.5} parent=11 // pred_region
        _
      $region20: #{i3d_bottleneck_forward.5} parent=11 // pred_fallthru
        _
      // Predicated region
      $region21: #{i3d_bottleneck_forward.5} parent=11 // pred_check
        %p280 = pneg %p119
      $region22: #{i3d_bottleneck_forward.5} parent=11 // pred_check_branch
        %282 = sbr.rel (%p280) target = $region24
      $region23: #{i3d_bottleneck_forward.5} parent=11 // pred_region
        _
      $region24: #{i3d_bottleneck_forward.5} parent=11 // pred_fallthru
        _
      // Predicated region
      $region25: #{i3d_bottleneck_forward.5} parent=11 // pred_check
        %p283 = pneg %p140
      $region26: #{i3d_bottleneck_forward.5} parent=11 // pred_check_branch
        %285 = sbr.rel (%p283) target = $region28
      $region27: #{i3d_bottleneck_forward.5} parent=11 // pred_region
        _
      $region28: #{i3d_bottleneck_forward.5} parent=11 // pred_fallthru
        _
      // Predicated region
      $region29: #{i3d_bottleneck_forward.5} parent=11 // pred_check
        %p286 = pneg %p161
      $region30: #{i3d_bottleneck_forward.5} parent=11 // pred_check_branch
        %288 = sbr.rel (%p286) target = $region32
      $region31: #{i3d_bottleneck_forward.5} parent=11 // pred_region
        _
      $region32: #{i3d_bottleneck_forward.5} parent=11 // pred_fallthru
        _
      // Predicated region
      $region33: #{i3d_bottleneck_forward.5} parent=11 // pred_check
        %p289 = pneg %p182
      $region34: #{i3d_bottleneck_forward.5} parent=11 // pred_check_branch
        %291 = sbr.rel (%p289) target = $region36
      $region35: #{i3d_bottleneck_forward.5} parent=11 // pred_region
        _
      $region36: #{i3d_bottleneck_forward.5} parent=11 // pred_fallthru
        _
      // Predicated region
      $region37: #{i3d_bottleneck_forward.5} parent=11 // pred_check
        %p292 = pneg %p203
      $region38: #{i3d_bottleneck_forward.5} parent=11 // pred_check_branch
        %294 = sbr.rel (%p292) target = $region40
      $region39: #{i3d_bottleneck_forward.5} parent=11 // pred_region
        _
      $region40: #{i3d_bottleneck_forward.5} parent=11 // pred_fallthru
        _
    $region12: #{i3d_bottleneck_forward.5} parent=5 // pred_fallthru
      _
    %p295 = scmp.lt.s32.totalorder %s16, 2
    // Predicated region
    $region41: #{i3d_bottleneck_forward.5} parent=5 // pred_check
      %p296 = pneg %p295
    $region42: #{i3d_bottleneck_forward.5} parent=5 // pred_check_branch
      %298 = sbr.rel (%p296) target = $region44
    $region43: #{i3d_bottleneck_forward.5} parent=5 // pred_region
      // Predicated region
      $region45: #{i3d_bottleneck_forward.5} parent=43 // pred_check
        %p299 = pneg %p50
      $region46: #{i3d_bottleneck_forward.5} parent=43 // pred_check_branch
        %301 = sbr.rel (%p299) target = $region48
      $region47: #{i3d_bottleneck_forward.5} parent=43 // pred_region
        %s302 = smul.u32 2, %s24
        %p303 = scmp.lt.s32.totalorder %s23, 1
        %s304 = scalar_select %p303, %s23, 1
        %p305 = scmp.lt.s32.totalorder %s302, 1
        %s306 = scalar_select %p305, %s302, 1
        %s307 = smul.addr %s304, 2
        %s308 = sadd.s32 %s306, %s307
        %s309 = smul.addr %s308, 4
        %s310 = scalar_lea.vmem %s0, %s309
        %s311 = smul.u32 2, %s24
      $region48: #{i3d_bottleneck_forward.5} parent=43 // pred_fallthru
        _
    $region44: #{i3d_bottleneck_forward.5} parent=5 // pred_fallthru
      _
    %p312 = scmp.le.s32.totalorder 1, %s16
    %p313 = scmp.lt.s32.totalorder %s16, 3
    %p314 = pnand %p312, %p313
    %p315 = pneg %p314
    // Predicated region
    $region49: #{i3d_bottleneck_forward.5} parent=5 // pred_check
      _
    $region50: #{i3d_bottleneck_forward.5} parent=5 // pred_check_branch
      %317 = sbr.rel (%p314) target = $region52
    $region51: #{i3d_bottleneck_forward.5} parent=5 // pred_region
      %s318 = ssub.s32 %s16, 1
      %s319 = smul.u32 2, %s26
      %p320 = scmp.lt.s32.totalorder %s25, 1
      %s321 = scalar_select %p320, %s25, 1
      %p322 = scmp.lt.s32.totalorder %s319, 1
      %s323 = scalar_select %p322, %s319, 1
      %s324 = smul.addr %s321, 2
      %s325 = sadd.s32 %s323, %s324
      %s326 = smul.addr %s325, 4
      %s327 = scalar_lea.vmem %s0, %s326
      %p328 = pneg %p56
      %p329 = pneg %p53
      %p330 = pneg %p77
      %p331 = pneg %p74
      %p332 = pneg %p98
      %p333 = pneg %p95
      %p334 = pneg %p119
      %p335 = pneg %p116
      %p336 = pneg %p140
      %p337 = pneg %p137
      %p338 = pneg %p161
      %p339 = pneg %p158
      %p340 = pneg %p182
      %p341 = pneg %p179
      %p342 = pneg %p203
      %p343 = pneg %p200
      %p344 = pneg %p231
      %p345 = pneg %p228
      %s346 = smul.u32 2, %s26
      %p347 = scmp.lt.s32.totalorder %s25, 1
      %s348 = scalar_select %p347, %s25, 1
      %p349 = scmp.lt.s32.totalorder %s346, 1
      %s350 = scalar_select %p349, %s346, 1
      %s351 = smul.addr %s348, 2
      %s352 = sadd.s32 %s350, %s351
      %s353 = smul.addr %s352, 4
      %s354 = scalar_lea.vmem %s8, %s353
      %p355 = pneg %p259
      %p356 = pneg %p256
      %p357 = scmp.lt.s32.totalorder %s25, 1
      %s358 = scalar_select %p357, %s25, 1
      %p359 = scmp.lt.s32.totalorder %s26, 0
      %s360 = scalar_select %p359, %s26, 0
      %s361 = sadd.s32 %s360, %s358
      %s362 = smul.addr %s361, 8
      %s363 = scalar_lea.vmem %s9, %s362
      %s364 = smul.u32 2, %s26
      %p365 = scmp.lt.s32.totalorder %s25, 1
      %s366 = scalar_select %p365, %s25, 1
      %p367 = scmp.lt.s32.totalorder %s364, 1
      %s368 = scalar_select %p367, %s364, 1
      %s369 = smul.addr %s366, 2
      %s370 = sadd.s32 %s368, %s369
      %s371 = smul.addr %s370, 4
      %s372 = scalar_lea.vmem %s0, %s371
      %s373 = smul.u32 2, %s26
      %s374 = smul.u32 2, %s26
      %p375 = scmp.lt.s32.totalorder %s25, 1
      %s376 = scalar_select %p375, %s25, 1
      %p377 = scmp.lt.s32.totalorder %s374, 1
      %s378 = scalar_select %p377, %s374, 1
      %s379 = smul.addr %s376, 2
      %s380 = sadd.s32 %s378, %s379
      %s381 = smul.addr %s380, 4
      %s382 = scalar_lea.vmem %s8, %s381
      %s383 = smul.u32 2, %s26
      %p384 = scmp.lt.s32.totalorder %s25, 1
      %s385 = scalar_select %p384, %s25, 1
      %p386 = scmp.lt.s32.totalorder %s26, 0
      %s387 = scalar_select %p386, %s26, 0
      %s388 = sadd.s32 %s387, %s385
      %s389 = smul.addr %s388, 8
      %s390 = scalar_lea.vmem %s9, %s389
      %v392 = vld [vmem:[%s372] sm:$0xff]
      %v393 = vunpack.c.l.bf16 %v392
      %v394 = vunpack.c.h.bf16 %v392
      %v395 = vld [vmem:[%s1] sm:$0xff]
      %397 = vset.pattern.permute.xlu0 0
      %398 = vperm.xlu0 %397, %v395
      %v399 = vpop.permute.xlu0 %398
      %v401 = vmul.f32 %v393, %v399
      %v402 = vmul.f32 %v394, %v399
      %v403 = vld [vmem:[%s2] sm:$0xff]
      %405 = vset.pattern.permute.xlu0 0
      %406 = vperm.xlu0 %405, %v403
      %v407 = vpop.permute.xlu0 %406
      %v409 = vadd.f32 %v401, %v407
      %v410 = vadd.f32 %v402, %v407
      %v411 = vmax.f32 %v409, 0.0
      %v412 = vmax.f32 %v410, 0.0
      %415 = vrot.lane.b32.xlu0 %v411, 1
      %v416 = vpop.permute.xlu0 %415
      %417 = vrot.lane.b32.xlu0 %v412, 1
      %v418 = vpop.permute.xlu0 %417
      %vm419 = vcmask 7168
      %v420 = vsel %vm419, %v416, %v418
      %v423 = vsel %vm419, 0.0, %v416
      %v424 = vld [vmem:[%s4] sm:$0x3]
      %v426 = vperm.slane %v424, 0
      %v427 = vperm.slane %v424, 1
      %v430 = vmul.f32 %v423, %v426
      %v431 = vmul.f32 %v420, %v427
      %432 = vrot.lane.b32.xlu0 %v411, 127
      %v433 = vpop.permute.xlu0 %432
      %434 = vrot.lane.b32.xlu0 %v412, 127
      %v435 = vpop.permute.xlu0 %434
      %vm436 = vcmask 1039360
      %v437 = vsel %vm436, %v433, %v435
      %v440 = vsel %vm436, %v435, 0.0
      %v441 = vld [vmem:[%s5] sm:$0x3]
      %v443 = vperm.slane %v441, 0
      %v444 = vperm.slane %v441, 1
      %v447 = vmul.f32 %v437, %v443
      %v448 = vmul.f32 %v440, %v444
      %v449 = vpack.c.bf16 %v430, %v430
      %v450 = vpack.c.bf16 %v431, %v431
      %v451 = vpack.c.bf16 %v411, %v411
      %v452 = vpack.c.bf16 %v412, %v412
      %v453 = vpack.c.bf16 %v447, %v447
      %v454 = vpack.c.bf16 %v448, %v448
      %s455 = scalar_lea.vmem %s3, 12
      %v456 = vld [vmem:[%s455] sm:$0xf]
      %s457 = scalar_lea.vmem %s3, 16
      %v458 = vld [vmem:[%s457] sm:$0xf]
      %vm459 = vcmask 64512
      %v461 = vsel %vm459, %v458, 0
      %vm463 = vcmask 1043456
      %v465 = vsel %vm463, %v451, 0
      %v468 = vsel %vm463, %v452, 0
      %470 = vmatpush.bf16.msra.mxu0 0
      %471 = vmatpush.bf16.msra.mxu0 0
      %472 = vmatpush.bf16.msra.mxu0 0
      %473 = vmatpush.bf16.msra.mxu0 0
      %474 = vmatpush.bf16.msra.mxu0 0
      %475 = vmatpush.bf16.msra.mxu0 0
      %476 = vmatpush.bf16.msra.mxu0 0
      %477 = vmatpush.bf16.msra.mxu0 %v465
      %478 = vmatmul.bf16.gmra.mxu0 %v461
      %v479 = vpop.f32.mrf.mxu0
      %v480 = vadd.f32 0.0, %v479
      %v481 = vpop.f32.mrf.mxu0
      %482 = vdwg.mxu0
      %483 = vmatpush.bf16.msra.mxu0 0
      %484 = vmatpush.bf16.msra.mxu0 0
      %485 = vmatpush.bf16.msra.mxu0 0
      %486 = vmatpush.bf16.msra.mxu0 0
      %487 = vmatpush.bf16.msra.mxu0 0
      %488 = vmatpush.bf16.msra.mxu0 0
      %489 = vmatpush.bf16.msra.mxu0 0
      %490 = vmatpush.bf16.msra.mxu0 %v468
      %491 = vmatmul.bf16.gmra.mxu0 %v461
      %v492 = vpop.f32.mrf.mxu0
      %v493 = vadd.f32 0.0, %v492
      %v494 = vpop.f32.mrf.mxu0
      %495 = vdwg.mxu0
      %v497 = vsel %vm459, %v456, 0
      %v500 = vsel %vm463, %v449, 0
      %v503 = vsel %vm463, %v450, 0
      %505 = vmatpush.bf16.msra.mxu0 0
      %506 = vmatpush.bf16.msra.mxu0 0
      %507 = vmatpush.bf16.msra.mxu0 0
      %508 = vmatpush.bf16.msra.mxu0 0
      %509 = vmatpush.bf16.msra.mxu0 0
      %510 = vmatpush.bf16.msra.mxu0 0
      %511 = vmatpush.bf16.msra.mxu0 0
      %512 = vmatpush.bf16.msra.mxu0 %v500
      %513 = vmatmul.bf16.gmra.mxu0 %v497
      %v514 = vpop.f32.mrf.mxu0
      %v515 = vadd.f32 %v480, %v514
      %v516 = vpop.f32.mrf.mxu0
      %517 = vdwg.mxu0
      %518 = vmatpush.bf16.msra.mxu0 0
      %519 = vmatpush.bf16.msra.mxu0 0
      %520 = vmatpush.bf16.msra.mxu0 0
      %521 = vmatpush.bf16.msra.mxu0 0
      %522 = vmatpush.bf16.msra.mxu0 0
      %523 = vmatpush.bf16.msra.mxu0 0
      %524 = vmatpush.bf16.msra.mxu0 0
      %525 = vmatpush.bf16.msra.mxu0 %v503
      %526 = vmatmul.bf16.gmra.mxu0 %v497
      %v527 = vpop.f32.mrf.mxu0
      %v528 = vadd.f32 %v493, %v527
      %v529 = vpop.f32.mrf.mxu0
      %530 = vdwg.mxu0
      %s531 = scalar_lea.vmem %s3, 20
      %v532 = vld [vmem:[%s531] sm:$0xf]
      %v534 = vsel %vm459, %v532, 0
      %v537 = vsel %vm463, %v453, 0
      %v540 = vsel %vm463, %v454, 0
      %542 = vmatpush.bf16.msra.mxu0 0
      %543 = vmatpush.bf16.msra.mxu0 0
      %544 = vmatpush.bf16.msra.mxu0 0
      %545 = vmatpush.bf16.msra.mxu0 0
      %546 = vmatpush.bf16.msra.mxu0 0
      %547 = vmatpush.bf16.msra.mxu0 0
      %548 = vmatpush.bf16.msra.mxu0 0
      %549 = vmatpush.bf16.msra.mxu0 %v537
      %550 = vmatmul.bf16.gmra.mxu0 %v534
      %v551 = vpop.f32.mrf.mxu0
      %v552 = vadd.f32 0.0, %v551
      %v553 = vpop.f32.mrf.mxu0
      %554 = vdwg.mxu0
      %555 = vmatpush.bf16.msra.mxu0 0
      %556 = vmatpush.bf16.msra.mxu0 0
      %557 = vmatpush.bf16.msra.mxu0 0
      %558 = vmatpush.bf16.msra.mxu0 0
      %559 = vmatpush.bf16.msra.mxu0 0
      %560 = vmatpush.bf16.msra.mxu0 0
      %561 = vmatpush.bf16.msra.mxu0 0
      %562 = vmatpush.bf16.msra.mxu0 %v540
      %563 = vmatmul.bf16.gmra.mxu0 %v534
      %v564 = vpop.f32.mrf.mxu0
      %v565 = vadd.f32 0.0, %v564
      %v566 = vpop.f32.mrf.mxu0
      %567 = vdwg.mxu0
      %v568 = vadd.f32 %v515, %v552
      %v569 = vadd.f32 %v528, %v565
      %v570 = vld [vmem:[%s3] sm:$0xf]
      %s571 = scalar_lea.vmem %s3, 4
      %v572 = vld [vmem:[%s571] sm:$0xf]
      %v574 = vsel %vm459, %v572, 0
      %576 = vmatpush.bf16.msra.mxu0 0
      %577 = vmatpush.bf16.msra.mxu0 0
      %578 = vmatpush.bf16.msra.mxu0 0
      %579 = vmatpush.bf16.msra.mxu0 0
      %580 = vmatpush.bf16.msra.mxu0 0
      %581 = vmatpush.bf16.msra.mxu0 0
      %582 = vmatpush.bf16.msra.mxu0 0
      %583 = vmatpush.bf16.msra.mxu0 %v465
      %584 = vmatmul.bf16.gmra.mxu0 %v574
      %v585 = vpop.f32.mrf.mxu0
      %v586 = vadd.f32 0.0, %v585
      %v587 = vpop.f32.mrf.mxu0
      %588 = vdwg.mxu0
      %589 = vmatpush.bf16.msra.mxu0 0
      %590 = vmatpush.bf16.msra.mxu0 0
      %591 = vmatpush.bf16.msra.mxu0 0
      %592 = vmatpush.bf16.msra.mxu0 0
      %593 = vmatpush.bf16.msra.mxu0 0
      %594 = vmatpush.bf16.msra.mxu0 0
      %595 = vmatpush.bf16.msra.mxu0 0
      %596 = vmatpush.bf16.msra.mxu0 %v468
      %597 = vmatmul.bf16.gmra.mxu0 %v574
      %v598 = vpop.f32.mrf.mxu0
      %v599 = vadd.f32 0.0, %v598
      %v600 = vpop.f32.mrf.mxu0
      %601 = vdwg.mxu0
      %v603 = vsel %vm459, %v570, 0
      %605 = vmatpush.bf16.msra.mxu0 0
      %606 = vmatpush.bf16.msra.mxu0 0
      %607 = vmatpush.bf16.msra.mxu0 0
      %608 = vmatpush.bf16.msra.mxu0 0
      %609 = vmatpush.bf16.msra.mxu0 0
      %610 = vmatpush.bf16.msra.mxu0 0
      %611 = vmatpush.bf16.msra.mxu0 0
      %612 = vmatpush.bf16.msra.mxu0 %v500
      %613 = vmatmul.bf16.gmra.mxu0 %v603
      %v614 = vpop.f32.mrf.mxu0
      %v615 = vadd.f32 %v586, %v614
      %v616 = vpop.f32.mrf.mxu0
      %617 = vdwg.mxu0
      %618 = vmatpush.bf16.msra.mxu0 0
      %619 = vmatpush.bf16.msra.mxu0 0
      %620 = vmatpush.bf16.msra.mxu0 0
      %621 = vmatpush.bf16.msra.mxu0 0
      %622 = vmatpush.bf16.msra.mxu0 0
      %623 = vmatpush.bf16.msra.mxu0 0
      %624 = vmatpush.bf16.msra.mxu0 0
      %625 = vmatpush.bf16.msra.mxu0 %v503
      %626 = vmatmul.bf16.gmra.mxu0 %v603
      %v627 = vpop.f32.mrf.mxu0
      %v628 = vadd.f32 %v599, %v627
      %v629 = vpop.f32.mrf.mxu0
      %630 = vdwg.mxu0
      %s631 = scalar_lea.vmem %s3, 8
      %v632 = vld [vmem:[%s631] sm:$0xf]
      %v634 = vsel %vm459, %v632, 0
      %636 = vmatpush.bf16.msra.mxu0 0
      %637 = vmatpush.bf16.msra.mxu0 0
      %638 = vmatpush.bf16.msra.mxu0 0
      %639 = vmatpush.bf16.msra.mxu0 0
      %640 = vmatpush.bf16.msra.mxu0 0
      %641 = vmatpush.bf16.msra.mxu0 0
      %642 = vmatpush.bf16.msra.mxu0 0
      %643 = vmatpush.bf16.msra.mxu0 %v537
      %644 = vmatmul.bf16.gmra.mxu0 %v634
      %v645 = vpop.f32.mrf.mxu0
      %v646 = vadd.f32 0.0, %v645
      %v647 = vpop.f32.mrf.mxu0
      %648 = vdwg.mxu0
      %649 = vmatpush.bf16.msra.mxu0 0
      %650 = vmatpush.bf16.msra.mxu0 0
      %651 = vmatpush.bf16.msra.mxu0 0
      %652 = vmatpush.bf16.msra.mxu0 0
      %653 = vmatpush.bf16.msra.mxu0 0
      %654 = vmatpush.bf16.msra.mxu0 0
      %655 = vmatpush.bf16.msra.mxu0 0
      %656 = vmatpush.bf16.msra.mxu0 %v540
      %657 = vmatmul.bf16.gmra.mxu0 %v634
      %v658 = vpop.f32.mrf.mxu0
      %v659 = vadd.f32 0.0, %v658
      %v660 = vpop.f32.mrf.mxu0
      %661 = vdwg.mxu0
      %v662 = vadd.f32 %v615, %v646
      %v663 = vadd.f32 %v628, %v659
      %s664 = scalar_lea.vmem %s3, 24
      %v665 = vld [vmem:[%s664] sm:$0xf]
      %s666 = scalar_lea.vmem %s3, 28
      %v667 = vld [vmem:[%s666] sm:$0xf]
      %v669 = vsel %vm459, %v667, 0
      %671 = vmatpush.bf16.msra.mxu0 0
      %672 = vmatpush.bf16.msra.mxu0 0
      %673 = vmatpush.bf16.msra.mxu0 0
      %674 = vmatpush.bf16.msra.mxu0 0
      %675 = vmatpush.bf16.msra.mxu0 0
      %676 = vmatpush.bf16.msra.mxu0 0
      %677 = vmatpush.bf16.msra.mxu0 0
      %678 = vmatpush.bf16.msra.mxu0 %v465
      %679 = vmatmul.bf16.gmra.mxu0 %v669
      %v680 = vpop.f32.mrf.mxu0
      %v681 = vadd.f32 0.0, %v680
      %v682 = vpop.f32.mrf.mxu0
      %683 = vdwg.mxu0
      %684 = vmatpush.bf16.msra.mxu0 0
      %685 = vmatpush.bf16.msra.mxu0 0
      %686 = vmatpush.bf16.msra.mxu0 0
      %687 = vmatpush.bf16.msra.mxu0 0
      %688 = vmatpush.bf16.msra.mxu0 0
      %689 = vmatpush.bf16.msra.mxu0 0
      %690 = vmatpush.bf16.msra.mxu0 0
      %691 = vmatpush.bf16.msra.mxu0 %v468
      %692 = vmatmul.bf16.gmra.mxu0 %v669
      %v693 = vpop.f32.mrf.mxu0
      %v694 = vadd.f32 0.0, %v693
      %v695 = vpop.f32.mrf.mxu0
      %696 = vdwg.mxu0
      %v698 = vsel %vm459, %v665, 0
      %700 = vmatpush.bf16.msra.mxu0 0
      %701 = vmatpush.bf16.msra.mxu0 0
      %702 = vmatpush.bf16.msra.mxu0 0
      %703 = vmatpush.bf16.msra.mxu0 0
      %704 = vmatpush.bf16.msra.mxu0 0
      %705 = vmatpush.bf16.msra.mxu0 0
      %706 = vmatpush.bf16.msra.mxu0 0
      %707 = vmatpush.bf16.msra.mxu0 %v500
      %708 = vmatmul.bf16.gmra.mxu0 %v698
      %v709 = vpop.f32.mrf.mxu0
      %v710 = vadd.f32 %v681, %v709
      %v711 = vpop.f32.mrf.mxu0
      %712 = vdwg.mxu0
      %713 = vmatpush.bf16.msra.mxu0 0
      %714 = vmatpush.bf16.msra.mxu0 0
      %715 = vmatpush.bf16.msra.mxu0 0
      %716 = vmatpush.bf16.msra.mxu0 0
      %717 = vmatpush.bf16.msra.mxu0 0
      %718 = vmatpush.bf16.msra.mxu0 0
      %719 = vmatpush.bf16.msra.mxu0 0
      %720 = vmatpush.bf16.msra.mxu0 %v503
      %721 = vmatmul.bf16.gmra.mxu0 %v698
      %v722 = vpop.f32.mrf.mxu0
      %v723 = vadd.f32 %v694, %v722
      %v724 = vpop.f32.mrf.mxu0
      %725 = vdwg.mxu0
      %s726 = scalar_lea.vmem %s3, 32
      %v727 = vld [vmem:[%s726] sm:$0xf]
      %v729 = vsel %vm459, %v727, 0
      %731 = vmatpush.bf16.msra.mxu0 0
      %732 = vmatpush.bf16.msra.mxu0 0
      %733 = vmatpush.bf16.msra.mxu0 0
      %734 = vmatpush.bf16.msra.mxu0 0
      %735 = vmatpush.bf16.msra.mxu0 0
      %736 = vmatpush.bf16.msra.mxu0 0
      %737 = vmatpush.bf16.msra.mxu0 0
      %738 = vmatpush.bf16.msra.mxu0 %v537
      %739 = vmatmul.bf16.gmra.mxu0 %v729
      %v740 = vpop.f32.mrf.mxu0
      %v741 = vadd.f32 0.0, %v740
      %v742 = vpop.f32.mrf.mxu0
      %743 = vdwg.mxu0
      %744 = vmatpush.bf16.msra.mxu0 0
      %745 = vmatpush.bf16.msra.mxu0 0
      %746 = vmatpush.bf16.msra.mxu0 0
      %747 = vmatpush.bf16.msra.mxu0 0
      %748 = vmatpush.bf16.msra.mxu0 0
      %749 = vmatpush.bf16.msra.mxu0 0
      %750 = vmatpush.bf16.msra.mxu0 0
      %751 = vmatpush.bf16.msra.mxu0 %v540
      %752 = vmatmul.bf16.gmra.mxu0 %v729
      %v753 = vpop.f32.mrf.mxu0
      %v754 = vadd.f32 0.0, %v753
      %v755 = vpop.f32.mrf.mxu0
      %756 = vdwg.mxu0
      %v757 = vadd.f32 %v710, %v741
      %v758 = vadd.f32 %v723, %v754
      %761 = vrot.lane.b32.xlu0 %v662, 8
      %v762 = vpop.permute.xlu0 %761
      %763 = vrot.lane.b32.xlu0 %v663, 8
      %v764 = vpop.permute.xlu0 %763
      %v765 = vsel %vm459, %v762, %v764
      %v768 = vsel %vm459, 0.0, %v762
      %v769 = vld [vmem:[%s6] sm:$0x3]
      %v771 = vperm.slane %v769, 0
      %v772 = vperm.slane %v769, 1
      %v775 = vmul.f32 %v768, %v771
      %v776 = vmul.f32 %v765, %v772
      %v777 = vadd.f32 %v568, %v775
      %v778 = vadd.f32 %v569, %v776
      %781 = vrot.lane.b32.xlu0 %v757, 120
      %v782 = vpop.permute.xlu0 %781
      %783 = vrot.lane.b32.xlu0 %v758, 120
      %v784 = vpop.permute.xlu0 %783
      %vm785 = vcmask 982016
      %v786 = vsel %vm785, %v782, %v784
      %v789 = vsel %vm785, %v784, 0.0
      %v790 = vld [vmem:[%s7] sm:$0x3]
      %v792 = vperm.slane %v790, 0
      %v793 = vperm.slane %v790, 1
      %v796 = vmul.f32 %v786, %v792
      %v797 = vmul.f32 %v789, %v793
      %v798 = vadd.f32 %v777, %v796
      %v799 = vadd.f32 %v778, %v797
      %v800 = vpack.c.bf16 %v799, %v798
      %801 = vst [vmem:[%s382] sm:$0xff] %v800
      %v802 = vadd.f32 %v798, %v799
      %803 = vadd.xlane.f32.xlu0 %v802
      %v804 = vpop.xlane.xlu0 %803
      %v805 = vmul.f32 %v798, %v798
      %v806 = vmul.f32 %v799, %v799
      %v807 = vadd.f32 %v805, %v806
      %808 = vadd.xlane.f32.xlu0 %v807
      %v809 = vpop.xlane.xlu0 %808
      %v810 = vsel %vm419, %v804, %v809
      %vm811 = vcmask 15360
      %812 = vst.msk [vmem:[%s390] sm:$0xff] %vm811, %v810
      %s813 = smul.u32 2, %s26
      %p814 = scmp.lt.s32.totalorder %s25, 1
      %s815 = scalar_select %p814, %s25, 1
      %p816 = scmp.lt.s32.totalorder %s813, 1
      %s817 = scalar_select %p816, %s813, 1
      %s818 = smul.addr %s815, 2
      %s819 = sadd.s32 %s817, %s818
      %s820 = smul.addr %s819, 4
      %s821 = scalar_lea.vmem %s8, %s820
      %p822 = scmp.lt.s32.totalorder %s25, 1
      %s823 = scalar_select %p822, %s25, 1
      %p824 = scmp.lt.s32.totalorder %s26, 0
      %s825 = scalar_select %p824, %s26, 0
      %s826 = sadd.s32 %s825, %s823
      %s827 = smul.addr %s826, 8
      %s828 = scalar_lea.vmem %s9, %s827
      // Predicated region
      $region53: #{i3d_bottleneck_forward.5} parent=51 // pred_check
        %p829 = pneg %p228
      $region54: #{i3d_bottleneck_forward.5} parent=51 // pred_check_branch
        %831 = sbr.rel (%p829) target = $region56
      $region55: #{i3d_bottleneck_forward.5} parent=51 // pred_region
        %s832 = smul.u32 2, %s26
      $region56: #{i3d_bottleneck_forward.5} parent=51 // pred_fallthru
        _
      // Predicated region
      $region57: #{i3d_bottleneck_forward.5} parent=51 // pred_check
        %p833 = pneg %p256
      $region58: #{i3d_bottleneck_forward.5} parent=51 // pred_check_branch
        %835 = sbr.rel (%p833) target = $region60
      $region59: #{i3d_bottleneck_forward.5} parent=51 // pred_region
        _
      $region60: #{i3d_bottleneck_forward.5} parent=51 // pred_fallthru
        _
    $region52: #{i3d_bottleneck_forward.5} parent=5 // pred_fallthru
      _
    %p836 = scmp.le.s32.totalorder 2, %s16
    // Predicated region
    $region61: #{i3d_bottleneck_forward.5} parent=5 // pred_check
      %p837 = pneg %p836
    $region62: #{i3d_bottleneck_forward.5} parent=5 // pred_check_branch
      %839 = sbr.rel (%p837) target = $region64
    $region63: #{i3d_bottleneck_forward.5} parent=5 // pred_region
      %s840 = ssub.s32 %s16, 2
      // Predicated region
      $region65: #{i3d_bottleneck_forward.5} parent=63 // pred_check
        %p841 = pneg %p234
      $region66: #{i3d_bottleneck_forward.5} parent=63 // pred_check_branch
        %843 = sbr.rel (%p841) target = $region68
      $region67: #{i3d_bottleneck_forward.5} parent=63 // pred_region
        %s844 = smul.u32 2, %s28
        %p845 = scmp.lt.s32.totalorder %s27, 1
        %s846 = scalar_select %p845, %s27, 1
        %p847 = scmp.lt.s32.totalorder %s844, 1
        %s848 = scalar_select %p847, %s844, 1
        %s849 = smul.addr %s846, 2
        %s850 = sadd.s32 %s848, %s849
        %s851 = smul.addr %s850, 4
        %s852 = scalar_lea.vmem %s8, %s851
      $region68: #{i3d_bottleneck_forward.5} parent=63 // pred_fallthru
        _
      // Predicated region
      $region69: #{i3d_bottleneck_forward.5} parent=63 // pred_check
        %p853 = pneg %p262
      $region70: #{i3d_bottleneck_forward.5} parent=63 // pred_check_branch
        %855 = sbr.rel (%p853) target = $region72
      $region71: #{i3d_bottleneck_forward.5} parent=63 // pred_region
        %p856 = scmp.lt.s32.totalorder %s27, 1
        %s857 = scalar_select %p856, %s27, 1
        %p858 = scmp.lt.s32.totalorder %s28, 0
        %s859 = scalar_select %p858, %s28, 0
        %s860 = sadd.s32 %s859, %s857
        %s861 = smul.addr %s860, 8
        %s862 = scalar_lea.vmem %s9, %s861
      $region72: #{i3d_bottleneck_forward.5} parent=63 // pred_fallthru
        _
    $region64: #{i3d_bottleneck_forward.5} parent=5 // pred_fallthru
      _
  $region6: #{i3d_bottleneck_forward.5} parent=0 // loop_footer
    %s20 = sadd.s32 1, %s16
  $region7: #{i3d_bottleneck_forward.5} parent=0 // loop_footer_branch
    %15 = sbr.rel target = $region3
  $region8: #{i3d_bottleneck_forward.5} parent=0 // loop_exit
    _

// kernel: i3d_bottleneck_forward.4
$region0: #{i3d_bottleneck_forward.4}
  #allocation0 [shape = 'u32[]', space=smem, size = 0x4, offset = 0x4, fixed_abs, tag = 'smem constant byte address 0x4 - core index']
  #allocation1 [shape = 'u32[72,128]{1,0:T(1,128)}', space=vmem, size = 0x9000, scoped, tag = 'internal scratch']
  %s0 = inlined_call_operand.vmem [shape: f32[2,32,256], index: 0, kind: input, shape index: {}]
  %s1 = inlined_call_operand.vmem [shape: bf16[3,8,32], index: 1, kind: input, shape index: {}]
  %s2 = inlined_call_operand.vmem [shape: bf16[2,8,256], index: 2, kind: output, shape index: {0}]
  %s3 = inlined_call_operand.vmem [shape: f32[2,8,2], index: 3, kind: output, shape index: {1}]
  %4 = xla_tuple %s2, %s3
  %s5 = sld [smem:[#allocation0]]
  $region49: #{i3d_bottleneck_forward.4} parent=0
    _
  %s7 = ssub.s32 1, %s5
  %s8 = scalar_select 0, %s7, %s5
  loop: start=0, step=1, limit=4
  $region2: #{i3d_bottleneck_forward.4} parent=0 // loop_pre_header
    _
  $region3: #{i3d_bottleneck_forward.4} parent=0 // loop_header
    %s10 = sphi 0, %s14
    %p11 = scmp.ge.s32.totalorder %s10, 4
    %s20 = sphi 0, %s22
    %s23 = sphi 0, %s20
    %s24 = sphi 0, %s23
    %s40 = sphi 0, %s24
    %s44 = sphi 0, %s44
    %s46 = sphi 0, %s44
    %s47 = sphi 0, %s46
    %s61 = sphi 0, %s47
    %s67 = sphi 0, %s69
    %s70 = sphi 0, %s67
    %s71 = sphi 0, %s70
    %s87 = sphi 0, %s71
    %s93 = sphi 0, %s95
    %s96 = sphi 0, %s93
    %s97 = sphi 0, %s96
    %s113 = sphi 0, %s97
  $region4: #{i3d_bottleneck_forward.4} parent=0 // loop_header_branch
    %13 = sbr.rel (%p11) target = $region8
  $region5: #{i3d_bottleneck_forward.4} parent=0 // loop_body
    %s15 = ssub.s32 %s10, 1
    %s16 = ssub.s32 %s10, 2
    %s17 = sadd.s32 %s10, 1
    %s18 = ssub.s32 %s10, %s17
    %p19 = scmp.eq.s32.totalorder %s18, 0
    %s21 = sadd.s32 %s20, 1
    %s22 = scalar_select %p19, %s20, %s21
    %p25 = pneg %p19
    %p26 = scmp.eq.s32.totalorder %s10, 1
    %p27 = por %p25, %p26
    %p28 = scmp.ne.s32.totalorder %s20, %s23
    %p29 = scmp.eq.s32.totalorder %s10, 0
    %p30 = por %p28, %p29
    %p31 = scmp.ne.s32.totalorder %s20, %s23
    %p32 = scmp.eq.s32.totalorder %s15, 1
    %p33 = por %p31, %p32
    %p34 = scmp.ne.s32.totalorder %s23, %s24
    %p35 = scmp.eq.s32.totalorder %s15, 0
    %p36 = por %p34, %p35
    %p37 = scmp.ne.s32.totalorder %s23, %s24
    %p38 = scmp.eq.s32.totalorder %s16, 1
    %p39 = por %p37, %p38
    %p41 = scmp.ne.s32.totalorder %s24, %s40
    %p42 = scmp.eq.s32.totalorder %s16, 0
    %p43 = por %p41, %p42
    %s45 = sadd.s32 %s44, 1
    %p48 = scmp.eq.s32.totalorder %s10, 1
    %p49 = scmp.ne.s32.totalorder %s44, %s46
    %p50 = scmp.eq.s32.totalorder %s10, 0
    %p51 = por %p49, %p50
    %p52 = scmp.ne.s32.totalorder %s44, %s46
    %p53 = scmp.eq.s32.totalorder %s15, 1
    %p54 = por %p52, %p53
    %p55 = scmp.ne.s32.totalorder %s46, %s47
    %p56 = scmp.eq.s32.totalorder %s15, 0
    %p57 = por %p55, %p56
    %p58 = scmp.ne.s32.totalorder %s46, %s47
    %p59 = scmp.eq.s32.totalorder %s16, 1
    %p60 = por %p58, %p59
    %p62 = scmp.ne.s32.totalorder %s47, %s61
    %p63 = scmp.eq.s32.totalorder %s16, 0
    %p64 = por %p62, %p63
    %s65 = ssub.s32 %s10, %s17
    %p66 = scmp.eq.s32.totalorder %s65, 0
    %s68 = sadd.s32 %s67, 1
    %s69 = scalar_select %p66, %s67, %s68
    %p72 = pneg %p66
    %p73 = scmp.eq.s32.totalorder %s10, 1
    %p74 = por %p72, %p73
    %p75 = scmp.ne.s32.totalorder %s67, %s70
    %p76 = scmp.eq.s32.totalorder %s10, 0
    %p77 = por %p75, %p76
    %p78 = scmp.ne.s32.totalorder %s67, %s70
    %p79 = scmp.eq.s32.totalorder %s15, 1
    %p80 = por %p78, %p79
    %p81 = scmp.ne.s32.totalorder %s70, %s71
    %p82 = scmp.eq.s32.totalorder %s15, 0
    %p83 = por %p81, %p82
    %p84 = scmp.ne.s32.totalorder %s70, %s71
    %p85 = scmp.eq.s32.totalorder %s16, 1
    %p86 = por %p84, %p85
    %p88 = scmp.ne.s32.totalorder %s71, %s87
    %p89 = scmp.eq.s32.totalorder %s16, 0
    %p90 = por %p88, %p89
    %s91 = ssub.s32 %s10, %s17
    %p92 = scmp.eq.s32.totalorder %s91, 0
    %s94 = sadd.s32 %s93, 1
    %s95 = scalar_select %p92, %s93, %s94
    %p98 = pneg %p92
    %p99 = scmp.eq.s32.totalorder %s10, 1
    %p100 = por %p98, %p99
    %p101 = scmp.ne.s32.totalorder %s93, %s96
    %p102 = scmp.eq.s32.totalorder %s10, 0
    %p103 = por %p101, %p102
    %p104 = scmp.ne.s32.totalorder %s93, %s96
    %p105 = scmp.eq.s32.totalorder %s15, 1
    %p106 = por %p104, %p105
    %p107 = scmp.ne.s32.totalorder %s96, %s97
    %p108 = scmp.eq.s32.totalorder %s15, 0
    %p109 = por %p107, %p108
    %p110 = scmp.ne.s32.totalorder %s96, %s97
    %p111 = scmp.eq.s32.totalorder %s16, 1
    %p112 = por %p110, %p111
    %p114 = scmp.ne.s32.totalorder %s97, %s113
    %p115 = scmp.eq.s32.totalorder %s16, 0
    %p116 = por %p114, %p115
    %p117 = scmp.le.s32.totalorder 1, %s10
    %p118 = scmp.lt.s32.totalorder %s10, 3
    %p119 = pnand %p117, %p118
    %p120 = pneg %p119
    // Predicated region
    $region9: #{i3d_bottleneck_forward.4} parent=5 // pred_check
      _
    $region10: #{i3d_bottleneck_forward.4} parent=5 // pred_check_branch
      %122 = sbr.rel (%p119) target = $region12
    $region11: #{i3d_bottleneck_forward.4} parent=5 // pred_region
      %s123 = ssub.s32 %s10, 1
      // Predicated region
      $region13: #{i3d_bottleneck_forward.4} parent=11 // pred_check
        %p124 = pneg %p57
      $region14: #{i3d_bottleneck_forward.4} parent=11 // pred_check_branch
        %126 = sbr.rel (%p124) target = $region16
      $region15: #{i3d_bottleneck_forward.4} parent=11 // pred_region
        _
      $region16: #{i3d_bottleneck_forward.4} parent=11 // pred_fallthru
        _
    $region12: #{i3d_bottleneck_forward.4} parent=5 // pred_fallthru
      _
    %p127 = scmp.lt.s32.totalorder %s10, 2
    // Predicated region
    $region17: #{i3d_bottleneck_forward.4} parent=5 // pred_check
      %p128 = pneg %p127
    $region18: #{i3d_bottleneck_forward.4} parent=5 // pred_check_branch
      %130 = sbr.rel (%p128) target = $region20
    $region19: #{i3d_bottleneck_forward.4} parent=5 // pred_region
      // Predicated region
      $region21: #{i3d_bottleneck_forward.4} parent=19 // pred_check
        %p131 = pneg %p30
      $region22: #{i3d_bottleneck_forward.4} parent=19 // pred_check_branch
        %133 = sbr.rel (%p131) target = $region24
      $region23: #{i3d_bottleneck_forward.4} parent=19 // pred_region
        %p134 = scmp.lt.s32.totalorder %s10, 1
        %s135 = scalar_select %p134, %s10, 1
        %s136 = smul.addr %s135, 8
        %s137 = smul.addr %s136, 8
        %s138 = scalar_lea.vmem %s0, %s137
      $region24: #{i3d_bottleneck_forward.4} parent=19 // pred_fallthru
        _
    $region20: #{i3d_bottleneck_forward.4} parent=5 // pred_fallthru
      _
    %p139 = scmp.le.s32.totalorder 1, %s10
    %p140 = scmp.lt.s32.totalorder %s10, 3
    %p141 = pnand %p139, %p140
    %p142 = pneg %p141
    // Predicated region
    $region25: #{i3d_bottleneck_forward.4} parent=5 // pred_check
      _
    $region26: #{i3d_bottleneck_forward.4} parent=5 // pred_check_branch
      %144 = sbr.rel (%p141) target = $region28
    $region27: #{i3d_bottleneck_forward.4} parent=5 // pred_region
      %s145 = ssub.s32 %s10, 1
      %p146 = scmp.lt.s32.totalorder %s15, 1
      %s147 = scalar_select %p146, %s15, 1
      %s148 = smul.addr %s147, 8
      %s149 = smul.addr %s148, 8
      %s150 = scalar_lea.vmem %s0, %s149
      %p151 = pneg %p36
      %p152 = pneg %p33
      %p153 = pneg %p57
      %p154 = pneg %p54
      %p155 = pneg %p83
      %p156 = pneg %p80
      %p157 = scmp.lt.s32.totalorder %s15, 1
      %s158 = scalar_select %p157, %s15, 1
      %s159 = smul.addr %s158, 2
      %s160 = smul.addr %s159, 4
      %s161 = scalar_lea.vmem %s2, %s160
      %p162 = pneg %p109
      %p163 = pneg %p106
      %p164 = scmp.lt.s32.totalorder %s15, 1
      %s165 = scalar_select %p164, %s15, 1
      %s166 = smul.addr %s165, 8
      %s167 = scalar_lea.vmem %s3, %s166
      %p168 = scmp.lt.s32.totalorder %s15, 1
      %s169 = scalar_select %p168, %s15, 1
      %s170 = smul.addr %s169, 8
      %s171 = smul.addr %s170, 8
      %s172 = scalar_lea.vmem %s0, %s171
      %p173 = scmp.lt.s32.totalorder %s15, 1
      %s174 = scalar_select %p173, %s15, 1
      %s175 = smul.addr %s174, 2
      %s176 = smul.addr %s175, 4
      %s177 = scalar_lea.vmem %s2, %s176
      %p178 = scmp.lt.s32.totalorder %s15, 1
      %s179 = scalar_select %p178, %s15, 1
      %s180 = smul.addr %s179, 8
      %s181 = scalar_lea.vmem %s3, %s180
      %v183 = vld [vmem:[%s172] sm:$0xff]
      %v184 = vld [vmem:[%s172 + $0x8] sm:$0xff]
      %v185 = vld [vmem:[%s172 + $0x10] sm:$0xff]
      %v186 = vld [vmem:[%s172 + $0x18] sm:$0xff]
      %v187 = vld [vmem:[%s172 + $0x20] sm:$0xff]
      %v188 = vld [vmem:[%s172 + $0x28] sm:$0xff]
      %v189 = vld [vmem:[%s172 + $0x30] sm:$0xff]
      %v190 = vld [vmem:[%s172 + $0x38] sm:$0xff]
      %v191 = vpack.c.bf16 %v185, %v183
      %v192 = vpack.c.bf16 %v186, %v184
      %v193 = vpack.c.bf16 %v189, %v187
      %v194 = vpack.c.bf16 %v190, %v188
      %s195 = scalar_lea.vmem %s1, 4
      %v196 = vld [vmem:[%s195] sm:$0xf]
      %v197 = vld [vmem:[%s1] sm:$0xf]
      %vm198 = vcmask 261120
      %v200 = vsel %vm198, %v197, 0
      %202 = vmatpush.bf16.msra.mxu0 0
      %203 = vmatpush.bf16.msra.mxu0 0
      %204 = vmatpush.bf16.msra.mxu0 0
      %205 = vmatpush.bf16.msra.mxu0 0
      %206 = vmatpush.bf16.msra.mxu0 0
      %207 = vmatpush.bf16.msra.mxu0 0
      %208 = vmatpush.bf16.msra.mxu0 %v193
      %209 = vmatpush.bf16.msra.mxu0 %v191
      %210 = vmatmul.bf16.gmra.mxu0 %v200
      %v211 = vpop.f32.mrf.mxu0
      %v212 = vadd.f32 0.0, %v211
      %v213 = vpop.f32.mrf.mxu0
      %214 = vdwg.mxu0
      %215 = vmatpush.bf16.msra.mxu0 0
      %216 = vmatpush.bf16.msra.mxu0 0
      %217 = vmatpush.bf16.msra.mxu0 0
      %218 = vmatpush.bf16.msra.mxu0 0
      %219 = vmatpush.bf16.msra.mxu0 0
      %220 = vmatpush.bf16.msra.mxu0 0
      %221 = vmatpush.bf16.msra.mxu0 %v194
      %222 = vmatpush.bf16.msra.mxu0 %v192
      %223 = vmatmul.bf16.gmra.mxu0 %v200
      %v224 = vpop.f32.mrf.mxu0
      %v225 = vadd.f32 0.0, %v224
      %v226 = vpop.f32.mrf.mxu0
      %227 = vdwg.mxu0
      %s228 = scalar_lea.vmem %s1, 8
      %v229 = vld [vmem:[%s228] sm:$0xf]
      %v231 = vsel %vm198, %v229, 0
      %233 = vmatpush.bf16.msra.mxu0 0
      %234 = vmatpush.bf16.msra.mxu0 0
      %235 = vmatpush.bf16.msra.mxu0 0
      %236 = vmatpush.bf16.msra.mxu0 0
      %237 = vmatpush.bf16.msra.mxu0 0
      %238 = vmatpush.bf16.msra.mxu0 0
      %239 = vmatpush.bf16.msra.mxu0 %v193
      %240 = vmatpush.bf16.msra.mxu0 %v191
      %241 = vmatmul.bf16.gmra.mxu0 %v231
      %v242 = vpop.f32.mrf.mxu0
      %v243 = vadd.f32 0.0, %v242
      %v244 = vpop.f32.mrf.mxu0
      %245 = vdwg.mxu0
      %246 = vmatpush.bf16.msra.mxu0 0
      %247 = vmatpush.bf16.msra.mxu0 0
      %248 = vmatpush.bf16.msra.mxu0 0
      %249 = vmatpush.bf16.msra.mxu0 0
      %250 = vmatpush.bf16.msra.mxu0 0
      %251 = vmatpush.bf16.msra.mxu0 0
      %252 = vmatpush.bf16.msra.mxu0 %v194
      %253 = vmatpush.bf16.msra.mxu0 %v192
      %254 = vmatmul.bf16.gmra.mxu0 %v231
      %v255 = vpop.f32.mrf.mxu0
      %v256 = vadd.f32 0.0, %v255
      %v257 = vpop.f32.mrf.mxu0
      %258 = vdwg.mxu0
      %261 = vrot.lane.b32.xlu0 %v212, 64
      %v262 = vpop.permute.xlu0 %261
      %263 = vrot.lane.b32.xlu0 %v225, 64
      %v264 = vpop.permute.xlu0 %263
      %vm265 = vcmask 523264
      %v266 = vsel %vm265, %v262, %v264
      %v269 = vsel %vm265, 0.0, %v262
      %v271 = vsel %vm198, %v196, 0
      %273 = vmatpush.bf16.msra.mxu0 0
      %274 = vmatpush.bf16.msra.mxu0 0
      %275 = vmatpush.bf16.msra.mxu0 0
      %276 = vmatpush.bf16.msra.mxu0 0
      %277 = vmatpush.bf16.msra.mxu0 0
      %278 = vmatpush.bf16.msra.mxu0 0
      %279 = vmatpush.bf16.msra.mxu0 %v193
      %280 = vmatpush.bf16.msra.mxu0 %v191
      %281 = vmatmul.bf16.gmra.mxu0 %v271
      %v282 = vpop.f32.mrf.mxu0
      %v283 = vadd.f32 %v269, %v282
      %v284 = vpop.f32.mrf.mxu0
      %285 = vdwg.mxu0
      %286 = vmatpush.bf16.msra.mxu0 0
      %287 = vmatpush.bf16.msra.mxu0 0
      %288 = vmatpush.bf16.msra.mxu0 0
      %289 = vmatpush.bf16.msra.mxu0 0
      %290 = vmatpush.bf16.msra.mxu0 0
      %291 = vmatpush.bf16.msra.mxu0 0
      %292 = vmatpush.bf16.msra.mxu0 %v194
      %293 = vmatpush.bf16.msra.mxu0 %v192
      %294 = vmatmul.bf16.gmra.mxu0 %v271
      %v295 = vpop.f32.mrf.mxu0
      %v296 = vadd.f32 %v266, %v295
      %v297 = vpop.f32.mrf.mxu0
      %298 = vdwg.mxu0
      %301 = vrot.lane.b32.xlu0 %v243, 64
      %v302 = vpop.permute.xlu0 %301
      %303 = vrot.lane.b32.xlu0 %v256, 64
      %v304 = vpop.permute.xlu0 %303
      %v305 = vsel %vm265, %v302, %v304
      %v308 = vsel %vm265, %v304, 0.0
      %v309 = vadd.f32 %v283, %v305
      %v310 = vadd.f32 %v296, %v308
      %v311 = vpack.c.bf16 %v310, %v309
      %312 = vst [vmem:[%s177] sm:$0xff] %v311
      %v313 = vadd.f32 %v309, %v310
      %314 = vadd.xlane.f32.xlu0 %v313
      %v315 = vpop.xlane.xlu0 %314
      %v316 = vmul.f32 %v309, %v309
      %v317 = vmul.f32 %v310, %v310
      %v318 = vadd.f32 %v316, %v317
      %319 = vadd.xlane.f32.xlu0 %v318
      %v320 = vpop.xlane.xlu0 %319
      %vm321 = vcmask 7168
      %v322 = vsel %vm321, %v315, %v320
      %vm323 = vcmask 15360
      %324 = vst.msk [vmem:[%s181] sm:$0xff] %vm323, %v322
      %p325 = scmp.lt.s32.totalorder %s15, 1
      %s326 = scalar_select %p325, %s15, 1
      %s327 = smul.addr %s326, 2
      %s328 = smul.addr %s327, 4
      %s329 = scalar_lea.vmem %s2, %s328
      %p330 = scmp.lt.s32.totalorder %s15, 1
      %s331 = scalar_select %p330, %s15, 1
      %s332 = smul.addr %s331, 8
      %s333 = scalar_lea.vmem %s3, %s332
      // Predicated region
      $region29: #{i3d_bottleneck_forward.4} parent=27 // pred_check
        %p334 = pneg %p80
      $region30: #{i3d_bottleneck_forward.4} parent=27 // pred_check_branch
        %336 = sbr.rel (%p334) target = $region32
      $region31: #{i3d_bottleneck_forward.4} parent=27 // pred_region
        _
      $region32: #{i3d_bottleneck_forward.4} parent=27 // pred_fallthru
        _
      // Predicated region
      $region33: #{i3d_bottleneck_forward.4} parent=27 // pred_check
        %p337 = pneg %p106
      $region34: #{i3d_bottleneck_forward.4} parent=27 // pred_check_branch
        %339 = sbr.rel (%p337) target = $region36
      $region35: #{i3d_bottleneck_forward.4} parent=27 // pred_region
        _
      $region36: #{i3d_bottleneck_forward.4} parent=27 // pred_fallthru
        _
    $region28: #{i3d_bottleneck_forward.4} parent=5 // pred_fallthru
      _
    %p340 = scmp.le.s32.totalorder 2, %s10
    // Predicated region
    $region37: #{i3d_bottleneck_forward.4} parent=5 // pred_check
      %p341 = pneg %p340
    $region38: #{i3d_bottleneck_forward.4} parent=5 // pred_check_branch
      %343 = sbr.rel (%p341) target = $region40
    $region39: #{i3d_bottleneck_forward.4} parent=5 // pred_region
      %s344 = ssub.s32 %s10, 2
      // Predicated region
      $region41: #{i3d_bottleneck_forward.4} parent=39 // pred_check
        %p345 = pneg %p86
      $region42: #{i3d_bottleneck_forward.4} parent=39 // pred_check_branch
        %347 = sbr.rel (%p345) target = $region44
      $region43: #{i3d_bottleneck_forward.4} parent=39 // pred_region
        %p348 = scmp.lt.s32.totalorder %s16, 1
        %s349 = scalar_select %p348, %s16, 1
        %s350 = smul.addr %s349, 2
        %s351 = smul.addr %s350, 4
        %s352 = scalar_lea.vmem %s2, %s351
      $region44: #{i3d_bottleneck_forward.4} parent=39 // pred_fallthru
        _
      // Predicated region
      $region45: #{i3d_bottleneck_forward.4} parent=39 // pred_check
        %p353 = pneg %p112
      $region46: #{i3d_bottleneck_forward.4} parent=39 // pred_check_branch
        %355 = sbr.rel (%p353) target = $region48
      $region47: #{i3d_bottleneck_forward.4} parent=39 // pred_region
        %p356 = scmp.lt.s32.totalorder %s16, 1
        %s357 = scalar_select %p356, %s16, 1
        %s358 = smul.addr %s357, 8
        %s359 = scalar_lea.vmem %s3, %s358
      $region48: #{i3d_bottleneck_forward.4} parent=39 // pred_fallthru
        _
    $region40: #{i3d_bottleneck_forward.4} parent=5 // pred_fallthru
      _
  $region6: #{i3d_bottleneck_forward.4} parent=0 // loop_footer
    %s14 = sadd.s32 1, %s10
  $region7: #{i3d_bottleneck_forward.4} parent=0 // loop_footer_branch
    %9 = sbr.rel target = $region3
  $region8: #{i3d_bottleneck_forward.4} parent=0 // loop_exit
    _

// kernel: i3d_bottleneck_forward.7
$region0: #{i3d_bottleneck_forward.7}
  #allocation0 [shape = 'u32[]', space=smem, size = 0x4, offset = 0x4, fixed_abs, tag = 'smem constant byte address 0x4 - core index']
  #allocation1 [shape = 'u32[72,128]{1,0:T(1,128)}', space=vmem, size = 0x9000, scoped, tag = 'internal scratch']
  %s0 = inlined_call_operand.vmem [shape: bf16[2,8,256], index: 0, kind: input, shape index: {}]
  %s1 = inlined_call_operand.vmem [shape: f32[2,32,256], index: 1, kind: input, shape index: {}]
  %s2 = inlined_call_operand.vmem [shape: f32[8,1], index: 2, kind: input, shape index: {}]
  %s3 = inlined_call_operand.vmem [shape: f32[8,1], index: 3, kind: input, shape index: {}]
  %s4 = inlined_call_operand.vmem [shape: bf16[32,8], index: 4, kind: input, shape index: {}]
  %s5 = inlined_call_operand.vmem [shape: f32[32,1], index: 5, kind: input, shape index: {}]
  %s6 = inlined_call_operand.vmem [shape: f32[32,1], index: 6, kind: input, shape index: {}]
  %s7 = inlined_call_operand.vmem [shape: f32[2,32,256], index: 7, kind: output, shape index: {}]
  %s8 = sld [smem:[#allocation0]]
  $region61: #{i3d_bottleneck_forward.7} parent=0
    _
  %s10 = ssub.s32 1, %s8
  %s11 = scalar_select 0, %s10, %s8
  loop: start=0, step=1, limit=4
  $region2: #{i3d_bottleneck_forward.7} parent=0 // loop_pre_header
    _
  $region3: #{i3d_bottleneck_forward.7} parent=0 // loop_header
    %s13 = sphi 0, %s17
    %p14 = scmp.ge.s32.totalorder %s13, 4
    %s20 = sphi 0, %s32
    %s21 = sphi 0, %s28
    %s22 = sphi 0, %s20
    %s23 = sphi 0, %s21
    %s24 = sphi 0, %s22
    %s25 = sphi 0, %s23
    %s37 = sphi 0, %s39
    %s40 = sphi 0, %s37
    %s41 = sphi 0, %s40
    %s57 = sphi 0, %s41
    %s65 = sphi 0, %s67
    %s68 = sphi 0, %s65
    %s69 = sphi 0, %s68
    %s85 = sphi 0, %s69
    %s89 = sphi 0, %s89
    %s91 = sphi 0, %s89
    %s92 = sphi 0, %s91
    %s106 = sphi 0, %s92
    %s110 = sphi 0, %s110
    %s112 = sphi 0, %s110
    %s113 = sphi 0, %s112
    %s127 = sphi 0, %s113
    %s131 = sphi 0, %s131
    %s133 = sphi 0, %s131
    %s134 = sphi 0, %s133
    %s148 = sphi 0, %s134
    %s152 = sphi 0, %s152
    %s154 = sphi 0, %s152
    %s155 = sphi 0, %s154
    %s169 = sphi 0, %s155
    %s173 = sphi 0, %s173
    %s175 = sphi 0, %s173
    %s176 = sphi 0, %s175
    %s190 = sphi 0, %s176
    %s198 = sphi 0, %s200
    %s201 = sphi 0, %s198
    %s202 = sphi 0, %s201
    %s218 = sphi 0, %s202
  $region4: #{i3d_bottleneck_forward.7} parent=0 // loop_header_branch
    %16 = sbr.rel (%p14) target = $region8
  $region5: #{i3d_bottleneck_forward.7} parent=0 // loop_body
    %s18 = ssub.s32 %s13, 1
    %s19 = ssub.s32 %s13, 2
    %s26 = sadd.s32 1, %s21
    %p27 = scmp.ge.s32.totalorder %s26, 1
    %s28 = scalar_select %p27, 0, %s26
    %s29 = sadd.s32 1, %s20
    %s30 = scalar_select %p27, %s29, %s20
    %p31 = scmp.ge.s32.totalorder %s30, 2
    %s32 = scalar_select %p31, 0, %s30
    %s33 = ssub.s32 %s20, %s32
    %s34 = ssub.s32 %s21, %s28
    %s35 = sor.u32 %s33, %s34
    %p36 = scmp.eq.s32.totalorder %s35, 0
    %s38 = sadd.s32 %s37, 1
    %s39 = scalar_select %p36, %s37, %s38
    %p42 = pneg %p36
    %p43 = scmp.eq.s32.totalorder %s13, 1
    %p44 = por %p42, %p43
    %p45 = scmp.ne.s32.totalorder %s37, %s40
    %p46 = scmp.eq.s32.totalorder %s13, 0
    %p47 = por %p45, %p46
    %p48 = scmp.ne.s32.totalorder %s37, %s40
    %p49 = scmp.eq.s32.totalorder %s18, 1
    %p50 = por %p48, %p49
    %p51 = scmp.ne.s32.totalorder %s40, %s41
    %p52 = scmp.eq.s32.totalorder %s18, 0
    %p53 = por %p51, %p52
    %p54 = scmp.ne.s32.totalorder %s40, %s41
    %p55 = scmp.eq.s32.totalorder %s19, 1
    %p56 = por %p54, %p55
    %p58 = scmp.ne.s32.totalorder %s41, %s57
    %p59 = scmp.eq.s32.totalorder %s19, 0
    %p60 = por %p58, %p59
    %s61 = ssub.s32 %s20, %s32
    %s62 = ssub.s32 %s21, %s28
    %s63 = sor.u32 %s61, %s62
    %p64 = scmp.eq.s32.totalorder %s63, 0
    %s66 = sadd.s32 %s65, 1
    %s67 = scalar_select %p64, %s65, %s66
    %p70 = pneg %p64
    %p71 = scmp.eq.s32.totalorder %s13, 1
    %p72 = por %p70, %p71
    %p73 = scmp.ne.s32.totalorder %s65, %s68
    %p74 = scmp.eq.s32.totalorder %s13, 0
    %p75 = por %p73, %p74
    %p76 = scmp.ne.s32.totalorder %s65, %s68
    %p77 = scmp.eq.s32.totalorder %s18, 1
    %p78 = por %p76, %p77
    %p79 = scmp.ne.s32.totalorder %s68, %s69
    %p80 = scmp.eq.s32.totalorder %s18, 0
    %p81 = por %p79, %p80
    %p82 = scmp.ne.s32.totalorder %s68, %s69
    %p83 = scmp.eq.s32.totalorder %s19, 1
    %p84 = por %p82, %p83
    %p86 = scmp.ne.s32.totalorder %s69, %s85
    %p87 = scmp.eq.s32.totalorder %s19, 0
    %p88 = por %p86, %p87
    %s90 = sadd.s32 %s89, 1
    %p93 = scmp.eq.s32.totalorder %s13, 1
    %p94 = scmp.ne.s32.totalorder %s89, %s91
    %p95 = scmp.eq.s32.totalorder %s13, 0
    %p96 = por %p94, %p95
    %p97 = scmp.ne.s32.totalorder %s89, %s91
    %p98 = scmp.eq.s32.totalorder %s18, 1
    %p99 = por %p97, %p98
    %p100 = scmp.ne.s32.totalorder %s91, %s92
    %p101 = scmp.eq.s32.totalorder %s18, 0
    %p102 = por %p100, %p101
    %p103 = scmp.ne.s32.totalorder %s91, %s92
    %p104 = scmp.eq.s32.totalorder %s19, 1
    %p105 = por %p103, %p104
    %p107 = scmp.ne.s32.totalorder %s92, %s106
    %p108 = scmp.eq.s32.totalorder %s19, 0
    %p109 = por %p107, %p108
    %s111 = sadd.s32 %s110, 1
    %p114 = scmp.eq.s32.totalorder %s13, 1
    %p115 = scmp.ne.s32.totalorder %s110, %s112
    %p116 = scmp.eq.s32.totalorder %s13, 0
    %p117 = por %p115, %p116
    %p118 = scmp.ne.s32.totalorder %s110, %s112
    %p119 = scmp.eq.s32.totalorder %s18, 1
    %p120 = por %p118, %p119
    %p121 = scmp.ne.s32.totalorder %s112, %s113
    %p122 = scmp.eq.s32.totalorder %s18, 0
    %p123 = por %p121, %p122
    %p124 = scmp.ne.s32.totalorder %s112, %s113
    %p125 = scmp.eq.s32.totalorder %s19, 1
    %p126 = por %p124, %p125
    %p128 = scmp.ne.s32.totalorder %s113, %s127
    %p129 = scmp.eq.s32.totalorder %s19, 0
    %p130 = por %p128, %p129
    %s132 = sadd.s32 %s131, 1
    %p135 = scmp.eq.s32.totalorder %s13, 1
    %p136 = scmp.ne.s32.totalorder %s131, %s133
    %p137 = scmp.eq.s32.totalorder %s13, 0
    %p138 = por %p136, %p137
    %p139 = scmp.ne.s32.totalorder %s131, %s133
    %p140 = scmp.eq.s32.totalorder %s18, 1
    %p141 = por %p139, %p140
    %p142 = scmp.ne.s32.totalorder %s133, %s134
    %p143 = scmp.eq.s32.totalorder %s18, 0
    %p144 = por %p142, %p143
    %p145 = scmp.ne.s32.totalorder %s133, %s134
    %p146 = scmp.eq.s32.totalorder %s19, 1
    %p147 = por %p145, %p146
    %p149 = scmp.ne.s32.totalorder %s134, %s148
    %p150 = scmp.eq.s32.totalorder %s19, 0
    %p151 = por %p149, %p150
    %s153 = sadd.s32 %s152, 1
    %p156 = scmp.eq.s32.totalorder %s13, 1
    %p157 = scmp.ne.s32.totalorder %s152, %s154
    %p158 = scmp.eq.s32.totalorder %s13, 0
    %p159 = por %p157, %p158
    %p160 = scmp.ne.s32.totalorder %s152, %s154
    %p161 = scmp.eq.s32.totalorder %s18, 1
    %p162 = por %p160, %p161
    %p163 = scmp.ne.s32.totalorder %s154, %s155
    %p164 = scmp.eq.s32.totalorder %s18, 0
    %p165 = por %p163, %p164
    %p166 = scmp.ne.s32.totalorder %s154, %s155
    %p167 = scmp.eq.s32.totalorder %s19, 1
    %p168 = por %p166, %p167
    %p170 = scmp.ne.s32.totalorder %s155, %s169
    %p171 = scmp.eq.s32.totalorder %s19, 0
    %p172 = por %p170, %p171
    %s174 = sadd.s32 %s173, 1
    %p177 = scmp.eq.s32.totalorder %s13, 1
    %p178 = scmp.ne.s32.totalorder %s173, %s175
    %p179 = scmp.eq.s32.totalorder %s13, 0
    %p180 = por %p178, %p179
    %p181 = scmp.ne.s32.totalorder %s173, %s175
    %p182 = scmp.eq.s32.totalorder %s18, 1
    %p183 = por %p181, %p182
    %p184 = scmp.ne.s32.totalorder %s175, %s176
    %p185 = scmp.eq.s32.totalorder %s18, 0
    %p186 = por %p184, %p185
    %p187 = scmp.ne.s32.totalorder %s175, %s176
    %p188 = scmp.eq.s32.totalorder %s19, 1
    %p189 = por %p187, %p188
    %p191 = scmp.ne.s32.totalorder %s176, %s190
    %p192 = scmp.eq.s32.totalorder %s19, 0
    %p193 = por %p191, %p192
    %s194 = ssub.s32 %s20, %s32
    %s195 = ssub.s32 %s21, %s28
    %s196 = sor.u32 %s194, %s195
    %p197 = scmp.eq.s32.totalorder %s196, 0
    %s199 = sadd.s32 %s198, 1
    %s200 = scalar_select %p197, %s198, %s199
    %p203 = pneg %p197
    %p204 = scmp.eq.s32.totalorder %s13, 1
    %p205 = por %p203, %p204
    %p206 = scmp.ne.s32.totalorder %s198, %s201
    %p207 = scmp.eq.s32.totalorder %s13, 0
    %p208 = por %p206, %p207
    %p209 = scmp.ne.s32.totalorder %s198, %s201
    %p210 = scmp.eq.s32.totalorder %s18, 1
    %p211 = por %p209, %p210
    %p212 = scmp.ne.s32.totalorder %s201, %s202
    %p213 = scmp.eq.s32.totalorder %s18, 0
    %p214 = por %p212, %p213
    %p215 = scmp.ne.s32.totalorder %s201, %s202
    %p216 = scmp.eq.s32.totalorder %s19, 1
    %p217 = por %p215, %p216
    %p219 = scmp.ne.s32.totalorder %s202, %s218
    %p220 = scmp.eq.s32.totalorder %s19, 0
    %p221 = por %p219, %p220
    %p222 = scmp.le.s32.totalorder 1, %s13
    %p223 = scmp.lt.s32.totalorder %s13, 3
    %p224 = pnand %p222, %p223
    %p225 = pneg %p224
    // Predicated region
    $region9: #{i3d_bottleneck_forward.7} parent=5 // pred_check
      _
    $region10: #{i3d_bottleneck_forward.7} parent=5 // pred_check_branch
      %227 = sbr.rel (%p224) target = $region12
    $region11: #{i3d_bottleneck_forward.7} parent=5 // pred_region
      %s228 = ssub.s32 %s13, 1
      // Predicated region
      $region13: #{i3d_bottleneck_forward.7} parent=11 // pred_check
        %p229 = pneg %p102
      $region14: #{i3d_bottleneck_forward.7} parent=11 // pred_check_branch
        %231 = sbr.rel (%p229) target = $region16
      $region15: #{i3d_bottleneck_forward.7} parent=11 // pred_region
        _
      $region16: #{i3d_bottleneck_forward.7} parent=11 // pred_fallthru
        _
      // Predicated region
      $region17: #{i3d_bottleneck_forward.7} parent=11 // pred_check
        %p232 = pneg %p123
      $region18: #{i3d_bottleneck_forward.7} parent=11 // pred_check_branch
        %234 = sbr.rel (%p232) target = $region20
      $region19: #{i3d_bottleneck_forward.7} parent=11 // pred_region
        _
      $region20: #{i3d_bottleneck_forward.7} parent=11 // pred_fallthru
        _
      // Predicated region
      $region21: #{i3d_bottleneck_forward.7} parent=11 // pred_check
        %p235 = pneg %p144
      $region22: #{i3d_bottleneck_forward.7} parent=11 // pred_check_branch
        %237 = sbr.rel (%p235) target = $region24
      $region23: #{i3d_bottleneck_forward.7} parent=11 // pred_region
        _
      $region24: #{i3d_bottleneck_forward.7} parent=11 // pred_fallthru
        _
      // Predicated region
      $region25: #{i3d_bottleneck_forward.7} parent=11 // pred_check
        %p238 = pneg %p165
      $region26: #{i3d_bottleneck_forward.7} parent=11 // pred_check_branch
        %240 = sbr.rel (%p238) target = $region28
      $region27: #{i3d_bottleneck_forward.7} parent=11 // pred_region
        _
      $region28: #{i3d_bottleneck_forward.7} parent=11 // pred_fallthru
        _
      // Predicated region
      $region29: #{i3d_bottleneck_forward.7} parent=11 // pred_check
        %p241 = pneg %p186
      $region30: #{i3d_bottleneck_forward.7} parent=11 // pred_check_branch
        %243 = sbr.rel (%p241) target = $region32
      $region31: #{i3d_bottleneck_forward.7} parent=11 // pred_region
        _
      $region32: #{i3d_bottleneck_forward.7} parent=11 // pred_fallthru
        _
    $region12: #{i3d_bottleneck_forward.7} parent=5 // pred_fallthru
      _
    %p244 = scmp.lt.s32.totalorder %s13, 2
    // Predicated region
    $region33: #{i3d_bottleneck_forward.7} parent=5 // pred_check
      %p245 = pneg %p244
    $region34: #{i3d_bottleneck_forward.7} parent=5 // pred_check_branch
      %247 = sbr.rel (%p245) target = $region36
    $region35: #{i3d_bottleneck_forward.7} parent=5 // pred_region
      // Predicated region
      $region37: #{i3d_bottleneck_forward.7} parent=35 // pred_check
        %p248 = pneg %p47
      $region38: #{i3d_bottleneck_forward.7} parent=35 // pred_check_branch
        %250 = sbr.rel (%p248) target = $region40
      $region39: #{i3d_bottleneck_forward.7} parent=35 // pred_region
        %s251 = smul.u32 2, %s21
        %p252 = scmp.lt.s32.totalorder %s20, 1
        %s253 = scalar_select %p252, %s20, 1
        %p254 = scmp.lt.s32.totalorder %s251, 1
        %s255 = scalar_select %p254, %s251, 1
        %s256 = smul.addr %s253, 2
        %s257 = sadd.s32 %s255, %s256
        %s258 = smul.addr %s257, 4
        %s259 = scalar_lea.vmem %s0, %s258
        %s260 = smul.u32 2, %s21
      $region40: #{i3d_bottleneck_forward.7} parent=35 // pred_fallthru
        _
      // Predicated region
      $region41: #{i3d_bottleneck_forward.7} parent=35 // pred_check
        %p261 = pneg %p75
      $region42: #{i3d_bottleneck_forward.7} parent=35 // pred_check_branch
        %263 = sbr.rel (%p261) target = $region44
      $region43: #{i3d_bottleneck_forward.7} parent=35 // pred_region
        %s264 = smul.u32 2, %s21
        %p265 = scmp.lt.s32.totalorder %s20, 1
        %s266 = scalar_select %p265, %s20, 1
        %p267 = scmp.lt.s32.totalorder %s264, 1
        %s268 = scalar_select %p267, %s264, 1
        %s269 = smul.addr %s266, 8
        %s270 = sadd.s32 %s268, %s269
        %s271 = smul.addr %s270, 8
        %s272 = scalar_lea.vmem %s1, %s271
        %s273 = smul.u32 2, %s21
      $region44: #{i3d_bottleneck_forward.7} parent=35 // pred_fallthru
        _
    $region36: #{i3d_bottleneck_forward.7} parent=5 // pred_fallthru
      _
    %p274 = scmp.le.s32.totalorder 1, %s13
    %p275 = scmp.lt.s32.totalorder %s13, 3
    %p276 = pnand %p274, %p275
    %p277 = pneg %p276
    // Predicated region
    $region45: #{i3d_bottleneck_forward.7} parent=5 // pred_check
      _
    $region46: #{i3d_bottleneck_forward.7} parent=5 // pred_check_branch
      %279 = sbr.rel (%p276) target = $region48
    $region47: #{i3d_bottleneck_forward.7} parent=5 // pred_region
      %s280 = ssub.s32 %s13, 1
      %s281 = smul.u32 2, %s23
      %p282 = scmp.lt.s32.totalorder %s22, 1
      %s283 = scalar_select %p282, %s22, 1
      %p284 = scmp.lt.s32.totalorder %s281, 1
      %s285 = scalar_select %p284, %s281, 1
      %s286 = smul.addr %s283, 2
      %s287 = sadd.s32 %s285, %s286
      %s288 = smul.addr %s287, 4
      %s289 = scalar_lea.vmem %s0, %s288
      %p290 = pneg %p53
      %p291 = pneg %p50
      %s292 = smul.u32 2, %s23
      %p293 = scmp.lt.s32.totalorder %s22, 1
      %s294 = scalar_select %p293, %s22, 1
      %p295 = scmp.lt.s32.totalorder %s292, 1
      %s296 = scalar_select %p295, %s292, 1
      %s297 = smul.addr %s294, 8
      %s298 = sadd.s32 %s296, %s297
      %s299 = smul.addr %s298, 8
      %s300 = scalar_lea.vmem %s1, %s299
      %p301 = pneg %p81
      %p302 = pneg %p78
      %p303 = pneg %p102
      %p304 = pneg %p99
      %p305 = pneg %p123
      %p306 = pneg %p120
      %p307 = pneg %p144
      %p308 = pneg %p141
      %p309 = pneg %p165
      %p310 = pneg %p162
      %p311 = pneg %p186
      %p312 = pneg %p183
      %p313 = pneg %p214
      %p314 = pneg %p211
      %s315 = smul.u32 2, %s23
      %p316 = scmp.lt.s32.totalorder %s22, 1
      %s317 = scalar_select %p316, %s22, 1
      %p318 = scmp.lt.s32.totalorder %s315, 1
      %s319 = scalar_select %p318, %s315, 1
      %s320 = smul.addr %s317, 8
      %s321 = sadd.s32 %s319, %s320
      %s322 = smul.addr %s321, 8
      %s323 = scalar_lea.vmem %s7, %s322
      %s324 = smul.u32 2, %s23
      %p325 = scmp.lt.s32.totalorder %s22, 1
      %s326 = scalar_select %p325, %s22, 1
      %p327 = scmp.lt.s32.totalorder %s324, 1
      %s328 = scalar_select %p327, %s324, 1
      %s329 = smul.addr %s326, 2
      %s330 = sadd.s32 %s328, %s329
      %s331 = smul.addr %s330, 4
      %s332 = scalar_lea.vmem %s0, %s331
      %s333 = smul.u32 2, %s23
      %s334 = smul.u32 2, %s23
      %p335 = scmp.lt.s32.totalorder %s22, 1
      %s336 = scalar_select %p335, %s22, 1
      %p337 = scmp.lt.s32.totalorder %s334, 1
      %s338 = scalar_select %p337, %s334, 1
      %s339 = smul.addr %s336, 8
      %s340 = sadd.s32 %s338, %s339
      %s341 = smul.addr %s340, 8
      %s342 = scalar_lea.vmem %s1, %s341
      %s343 = smul.u32 2, %s23
      %s344 = smul.u32 2, %s23
      %p345 = scmp.lt.s32.totalorder %s22, 1
      %s346 = scalar_select %p345, %s22, 1
      %p347 = scmp.lt.s32.totalorder %s344, 1
      %s348 = scalar_select %p347, %s344, 1
      %s349 = smul.addr %s346, 8
      %s350 = sadd.s32 %s348, %s349
      %s351 = smul.addr %s350, 8
      %s352 = scalar_lea.vmem %s7, %s351
      %s353 = smul.u32 2, %s23
      %v355 = vld [vmem:[%s332] sm:$0xff]
      %v356 = vunpack.c.l.bf16 %v355
      %v357 = vunpack.c.h.bf16 %v355
      %v358 = vld [vmem:[%s2] sm:$0xff]
      %360 = vset.pattern.permute.xlu0 0
      %361 = vperm.xlu0 %360, %v358
      %v362 = vpop.permute.xlu0 %361
      %v364 = vmul.f32 %v356, %v362
      %v365 = vmul.f32 %v357, %v362
      %v366 = vld [vmem:[%s3] sm:$0xff]
      %368 = vset.pattern.permute.xlu0 0
      %369 = vperm.xlu0 %368, %v366
      %v370 = vpop.permute.xlu0 %369
      %v372 = vadd.f32 %v364, %v370
      %v373 = vadd.f32 %v365, %v370
      %v374 = vmax.f32 %v372, 0.0
      %v375 = vmax.f32 %v373, 0.0
      %v376 = vld [vmem:[%s4] sm:$0xf]
      %v377 = vld [vmem:[%s4 + $0x4] sm:$0xf]
      %v378 = vld [vmem:[%s4 + $0x8] sm:$0xf]
      %v379 = vld [vmem:[%s4 + $0xc] sm:$0xf]
      %v380 = vpack.c.bf16 %v374, %v374
      %v381 = vpack.c.bf16 %v375, %v375
      %v386 = vunpack.c.l.b16 %v376
      %v387 = vunpack.c.l.b16 %v377
      %v388 = vunpack.c.l.b16 %v378
      %v389 = vunpack.c.l.b16 %v379
      %v390 = vpack.c.b16 %v387, %v386
      %v391 = vpack.c.b16 %v389, %v388
      %vm392 = vcmask 64512
      %v394 = vsel %vm392, %v390, 0
      %v397 = vsel %vm392, %v391, 0
      %vm399 = vcmask 1043456
      %v401 = vsel %vm399, %v380, 0
      %v404 = vsel %vm399, %v381, 0
      %406 = vmatpush.bf16.msra.mxu0 0
      %407 = vmatpush.bf16.msra.mxu0 0
      %408 = vmatpush.bf16.msra.mxu0 0
      %409 = vmatpush.bf16.msra.mxu0 0
      %410 = vmatpush.bf16.msra.mxu0 0
      %411 = vmatpush.bf16.msra.mxu0 0
      %412 = vmatpush.bf16.msra.mxu0 0
      %413 = vmatpush.bf16.msra.mxu0 %v401
      %414 = vmatmul.bf16.gmra.mxu0 %v394
      %v415 = vpop.f32.mrf.mxu0
      %v416 = vadd.f32 0.0, %v415
      %v417 = vpop.f32.mrf.mxu0
      %v418 = vadd.f32 0.0, %v417
      %419 = vmatmul.bf16.gmra.mxu0 %v397
      %v420 = vpop.f32.mrf.mxu0
      %v421 = vadd.f32 0.0, %v420
      %v422 = vpop.f32.mrf.mxu0
      %v423 = vadd.f32 0.0, %v422
      %424 = vdwg.mxu0
      %425 = vmatpush.bf16.msra.mxu0 0
      %426 = vmatpush.bf16.msra.mxu0 0
      %427 = vmatpush.bf16.msra.mxu0 0
      %428 = vmatpush.bf16.msra.mxu0 0
      %429 = vmatpush.bf16.msra.mxu0 0
      %430 = vmatpush.bf16.msra.mxu0 0
      %431 = vmatpush.bf16.msra.mxu0 0
      %432 = vmatpush.bf16.msra.mxu0 %v404
      %433 = vmatmul.bf16.gmra.mxu0 %v394
      %v434 = vpop.f32.mrf.mxu0
      %v435 = vadd.f32 0.0, %v434
      %v436 = vpop.f32.mrf.mxu0
      %v437 = vadd.f32 0.0, %v436
      %438 = vmatmul.bf16.gmra.mxu0 %v397
      %v439 = vpop.f32.mrf.mxu0
      %v440 = vadd.f32 0.0, %v439
      %v441 = vpop.f32.mrf.mxu0
      %v442 = vadd.f32 0.0, %v441
      %443 = vdwg.mxu0
      %v444 = vld [vmem:[%s5] sm:$0xff]
      %v445 = vld [vmem:[%s5 + $0x8] sm:$0xff]
      %v446 = vld [vmem:[%s5 + $0x10] sm:$0xff]
      %v447 = vld [vmem:[%s5 + $0x18] sm:$0xff]
      %449 = vset.pattern.permute.xlu0 0
      %450 = vperm.xlu0 %449, %v444
      %v451 = vpop.permute.xlu0 %450
      %454 = vset.pattern.permute.xlu0 0
      %455 = vperm.xlu0 %454, %v445
      %v456 = vpop.permute.xlu0 %455
      %459 = vset.pattern.permute.xlu0 0
      %460 = vperm.xlu0 %459, %v446
      %v461 = vpop.permute.xlu0 %460
      %464 = vset.pattern.permute.xlu0 0
      %465 = vperm.xlu0 %464, %v447
      %v466 = vpop.permute.xlu0 %465
      %v468 = vmul.f32 %v416, %v451
      %v469 = vmul.f32 %v435, %v451
      %v470 = vmul.f32 %v418, %v456
      %v471 = vmul.f32 %v437, %v456
      %v472 = vmul.f32 %v421, %v461
      %v473 = vmul.f32 %v440, %v461
      %v474 = vmul.f32 %v423, %v466
      %v475 = vmul.f32 %v442, %v466
      %v476 = vld [vmem:[%s6] sm:$0xff]
      %v477 = vld [vmem:[%s6 + $0x8] sm:$0xff]
      %v478 = vld [vmem:[%s6 + $0x10] sm:$0xff]
      %v479 = vld [vmem:[%s6 + $0x18] sm:$0xff]
      %481 = vset.pattern.permute.xlu0 0
      %482 = vperm.xlu0 %481, %v476
      %v483 = vpop.permute.xlu0 %482
      %486 = vset.pattern.permute.xlu0 0
      %487 = vperm.xlu0 %486, %v477
      %v488 = vpop.permute.xlu0 %487
      %491 = vset.pattern.permute.xlu0 0
      %492 = vperm.xlu0 %491, %v478
      %v493 = vpop.permute.xlu0 %492
      %496 = vset.pattern.permute.xlu0 0
      %497 = vperm.xlu0 %496, %v479
      %v498 = vpop.permute.xlu0 %497
      %v500 = vadd.f32 %v468, %v483
      %v501 = vadd.f32 %v469, %v483
      %v502 = vadd.f32 %v470, %v488
      %v503 = vadd.f32 %v471, %v488
      %v504 = vadd.f32 %v472, %v493
      %v505 = vadd.f32 %v473, %v493
      %v506 = vadd.f32 %v474, %v498
      %v507 = vadd.f32 %v475, %v498
      %v508 = vld [vmem:[%s342] sm:$0xff]
      %v509 = vld [vmem:[%s342 + $0x8] sm:$0xff]
      %v510 = vld [vmem:[%s342 + $0x10] sm:$0xff]
      %v511 = vld [vmem:[%s342 + $0x18] sm:$0xff]
      %v512 = vld [vmem:[%s342 + $0x20] sm:$0xff]
      %v513 = vld [vmem:[%s342 + $0x28] sm:$0xff]
      %v514 = vld [vmem:[%s342 + $0x30] sm:$0xff]
      %v515 = vld [vmem:[%s342 + $0x38] sm:$0xff]
      %v516 = vadd.f32 %v500, %v508
      %v517 = vadd.f32 %v501, %v509
      %v518 = vadd.f32 %v502, %v510
      %v519 = vadd.f32 %v503, %v511
      %v520 = vadd.f32 %v504, %v512
      %v521 = vadd.f32 %v505, %v513
      %v522 = vadd.f32 %v506, %v514
      %v523 = vadd.f32 %v507, %v515
      %v524 = vmax.f32 %v516, 0.0
      %v525 = vmax.f32 %v517, 0.0
      %v526 = vmax.f32 %v518, 0.0
      %v527 = vmax.f32 %v519, 0.0
      %v528 = vmax.f32 %v520, 0.0
      %v529 = vmax.f32 %v521, 0.0
      %v530 = vmax.f32 %v522, 0.0
      %v531 = vmax.f32 %v523, 0.0
      %532 = vst [vmem:[%s352] sm:$0xff] %v524
      %533 = vst [vmem:[%s352 + $0x8] sm:$0xff] %v525
      %534 = vst [vmem:[%s352 + $0x10] sm:$0xff] %v526
      %535 = vst [vmem:[%s352 + $0x18] sm:$0xff] %v527
      %536 = vst [vmem:[%s352 + $0x20] sm:$0xff] %v528
      %537 = vst [vmem:[%s352 + $0x28] sm:$0xff] %v529
      %538 = vst [vmem:[%s352 + $0x30] sm:$0xff] %v530
      %539 = vst [vmem:[%s352 + $0x38] sm:$0xff] %v531
      %s540 = smul.u32 2, %s23
      %p541 = scmp.lt.s32.totalorder %s22, 1
      %s542 = scalar_select %p541, %s22, 1
      %p543 = scmp.lt.s32.totalorder %s540, 1
      %s544 = scalar_select %p543, %s540, 1
      %s545 = smul.addr %s542, 8
      %s546 = sadd.s32 %s544, %s545
      %s547 = smul.addr %s546, 8
      %s548 = scalar_lea.vmem %s7, %s547
      // Predicated region
      $region49: #{i3d_bottleneck_forward.7} parent=47 // pred_check
        %p549 = pneg %p211
      $region50: #{i3d_bottleneck_forward.7} parent=47 // pred_check_branch
        %551 = sbr.rel (%p549) target = $region52
      $region51: #{i3d_bottleneck_forward.7} parent=47 // pred_region
        %s552 = smul.u32 2, %s23
      $region52: #{i3d_bottleneck_forward.7} parent=47 // pred_fallthru
        _
    $region48: #{i3d_bottleneck_forward.7} parent=5 // pred_fallthru
      _
    %p553 = scmp.le.s32.totalorder 2, %s13
    // Predicated region
    $region53: #{i3d_bottleneck_forward.7} parent=5 // pred_check
      %p554 = pneg %p553
    $region54: #{i3d_bottleneck_forward.7} parent=5 // pred_check_branch
      %556 = sbr.rel (%p554) target = $region56
    $region55: #{i3d_bottleneck_forward.7} parent=5 // pred_region
      %s557 = ssub.s32 %s13, 2
      // Predicated region
      $region57: #{i3d_bottleneck_forward.7} parent=55 // pred_check
        %p558 = pneg %p217
      $region58: #{i3d_bottleneck_forward.7} parent=55 // pred_check_branch
        %560 = sbr.rel (%p558) target = $region60
      $region59: #{i3d_bottleneck_forward.7} parent=55 // pred_region
        %s561 = smul.u32 2, %s25
        %p562 = scmp.lt.s32.totalorder %s24, 1
        %s563 = scalar_select %p562, %s24, 1
        %p564 = scmp.lt.s32.totalorder %s561, 1
        %s565 = scalar_select %p564, %s561, 1
        %s566 = smul.addr %s563, 8
        %s567 = sadd.s32 %s565, %s566
        %s568 = smul.addr %s567, 8
        %s569 = scalar_lea.vmem %s7, %s568
      $region60: #{i3d_bottleneck_forward.7} parent=55 // pred_fallthru
        _
    $region56: #{i3d_bottleneck_forward.7} parent=5 // pred_fallthru
      _
  $region6: #{i3d_bottleneck_forward.7} parent=0 // loop_footer
    %s17 = sadd.s32 1, %s13
  $region7: #{i3d_bottleneck_forward.7} parent=0 // loop_footer_branch
    %12 = sbr.rel target = $region3
  $region8: #{i3d_bottleneck_forward.7} parent=0 // loop_exit
    _

</llo_original>
